<compile_context>
chip_gen: v7x
topology: tpu7x:2x2x1
jax: 0.10.0
libtpu: 0.0.40
codegen_flags: <defaults>
</compile_context>

<pallas_src>
import math
import functools

import jax
import jax.numpy as jnp
from jax import lax
from jax.experimental import pallas as pl
from jax.experimental.pallas import tpu as pltpu

HEAD_DIM = 128
IN_DIM = 512
COMPUTE_DTYPE = jnp.bfloat16


# ---------------------------------------------------------------------------
# Generation-aware VMEM limit / tile sizes
# ---------------------------------------------------------------------------
def _tpu_vmem_capacity_bytes():
    try:
        return int(pltpu.get_tpu_info().vmem_capacity_bytes)
    except Exception:
        return 64 * 1024 * 1024        # conservative (v7x-sized) fallback


_VMEM_CAP = _tpu_vmem_capacity_bytes()
_BIG_VMEM = _VMEM_CAP >= 100 * 1024 * 1024           # v5e / v6e: 128 MiB physical
_VMEM_LIMIT = int(min((_VMEM_CAP * 3) // 4, 96 * 1024 * 1024))
_M_TILE_MAX = 1024 if _BIG_VMEM else 512              # bf16 tiles: 1024 rows fit easily


def _pick_m_tile(M):
    """Row tile for the linears: full M when small, else generation-dependent max."""
    return M if M <= _M_TILE_MAX else _M_TILE_MAX


def _pick_seq_tile(S, max_tile):
    """Seq tile for attention: full S when small, else a 128-multiple divisor."""
    if S <= max_tile:
        return S
    for t in (512, 256, 128):
        if t <= max_tile and S % t == 0:
            return t
    # TODO(synk): pad/mask ragged S > max_tile that is not a multiple of 128.
    return S


# ---------------------------------------------------------------------------
# Pallas kernel: fused Q/K/V projections, three distinct inputs (cross-attn)
# ---------------------------------------------------------------------------
def _qkv_proj_kernel(qx, kx, vx, wq, wk, wv, bq, bk, bv, qo, ko, vo):
    qo[...] = (jnp.dot(qx[...], wq[...], preferred_element_type=jnp.float32)
               + bq[...]).astype(qo.dtype)
    ko[...] = (jnp.dot(kx[...], wk[...], preferred_element_type=jnp.float32)
               + bk[...]).astype(ko.dtype)
    vo[...] = (jnp.dot(vx[...], wv[...], preferred_element_type=jnp.float32)
               + bv[...]).astype(vo.dtype)


def pallas_qkv_proj(qx, kx, vx, wq, wk, wv, bq, bk, bv):
    """qx,kx,vx: [M,512] bf16; w*: [512,N] bf16; b*: [N] f32 -> (q,k,v) each [M,N] bf16."""
    M, K = qx.shape
    N = wq.shape[1]
    TM = _pick_m_tile(M)

    x_spec = pl.BlockSpec((TM, K), lambda i: (i, 0))
    w_spec = pl.BlockSpec((K, N), lambda i: (0, 0))     # weights stay VMEM-resident
    b_spec = pl.BlockSpec((1, N), lambda i: (0, 0))
    o_spec = pl.BlockSpec((TM, N), lambda i: (i, 0))
    out_sds = jax.ShapeDtypeStruct((M, N), COMPUTE_DTYPE)

    return pl.pallas_call(
        _qkv_proj_kernel,
        out_shape=(out_sds, out_sds, out_sds),
        grid=(pl.cdiv(M, TM),),
        in_specs=[x_spec, x_spec, x_spec,
                  w_spec, w_spec, w_spec,
                  b_spec, b_spec, b_spec],
        out_specs=(o_spec, o_spec, o_spec),
        compiler_params=pltpu.CompilerParams(
            dimension_semantics=("parallel",),
            vmem_limit_bytes=_VMEM_LIMIT),
    )(qx, kx, vx, wq, wk, wv,
      bq.reshape(1, N), bk.reshape(1, N), bv.reshape(1, N))


# ---------------------------------------------------------------------------
# Pallas kernel: self-attention fast path — single input, [Wq|Wk|Wv] concatenated
# ---------------------------------------------------------------------------
def _qkv_fused_kernel(x_ref, w_ref, b_ref, qo, ko, vo):
    y = (jnp.dot(x_ref[...], w_ref[...], preferred_element_type=jnp.float32)
         + b_ref[...])                                   # [TM, 3N] f32
    N = qo.shape[-1]
    qo[...] = y[:, :N].astype(qo.dtype)                  # static, lane-aligned splits
    ko[...] = y[:, N:2 * N].astype(ko.dtype)
    vo[...] = y[:, 2 * N:].astype(vo.dtype)


def pallas_qkv_proj_fused(x, wqkv, bqkv):
    """x: [M,512] bf16; wqkv: [512,3N] bf16; bqkv: [3N] f32 -> (q,k,v) each [M,N] bf16."""
    M, K = x.shape
    N3 = wqkv.shape[1]
    N = N3 // 3
    TM = _pick_m_tile(M)
    out_sds = jax.ShapeDtypeStruct((M, N), COMPUTE_DTYPE)
    o_spec = pl.BlockSpec((TM, N), lambda i: (i, 0))

    return pl.pallas_call(
        _qkv_fused_kernel,
        out_shape=(out_sds, out_sds, out_sds),
        grid=(pl.cdiv(M, TM),),
        in_specs=[pl.BlockSpec((TM, K), lambda i: (i, 0)),
                  pl.BlockSpec((K, N3), lambda i: (0, 0)),
                  pl.BlockSpec((1, N3), lambda i: (0, 0))],
        out_specs=(o_spec, o_spec, o_spec),
        compiler_params=pltpu.CompilerParams(
            dimension_semantics=("parallel",),
            vmem_limit_bytes=_VMEM_LIMIT),
    )(x, wqkv, bqkv.reshape(1, N3))


# ---------------------------------------------------------------------------
# Pallas kernel: tiled linear  y = x @ w + b   (merge projection)
# ---------------------------------------------------------------------------
def _linear_kernel(x_ref, w_ref, b_ref, o_ref):
    o_ref[...] = (jnp.dot(x_ref[...], w_ref[...], preferred_element_type=jnp.float32)
                  + b_ref[...]).astype(o_ref.dtype)


def pallas_linear(x, w, b, out_dtype):
    """x: [M,K] bf16, w: [K,N] bf16, b: [N] f32 -> [M,N] out_dtype (M-tiled, pipelined)."""
    M, K = x.shape
    N = w.shape[1]
    TM = _pick_m_tile(M)
    return pl.pallas_call(
        _linear_kernel,
        out_shape=jax.ShapeDtypeStruct((M, N), out_dtype),
        grid=(pl.cdiv(M, TM),),
        in_specs=[pl.BlockSpec((TM, K), lambda i: (i, 0)),
                  pl.BlockSpec((K, N), lambda i: (0, 0)),
                  pl.BlockSpec((1, N), lambda i: (0, 0))],
        out_specs=pl.BlockSpec((TM, N), lambda i: (i, 0)),
        compiler_params=pltpu.CompilerParams(
            dimension_semantics=("parallel",),
            vmem_limit_bytes=_VMEM_LIMIT),
    )(x, w, b.reshape(1, N))


# ---------------------------------------------------------------------------
# Pallas kernel: flash-style attention, heads sliced via BlockSpec index maps
# ---------------------------------------------------------------------------
def _flash_attn_kernel(q_ref, k_ref, v_ref, bias_ref, o_ref, m_sc, l_sc, acc_sc):
    # q_ref: [TQ, Dh] bf16   k_ref/v_ref: [TKV, Dh] bf16   bias_ref: [1, TKV] f32
    # q already carries 1/sqrt(d_k) (folded into W_q in the wrapper).
    ki = pl.program_id(3)

    @pl.when(ki == 0)
    def _():
        m_sc[...] = jnp.full_like(m_sc, -jnp.inf)
        l_sc[...] = jnp.zeros_like(l_sc)
        acc_sc[...] = jnp.zeros_like(acc_sc)

    # scores = q @ k^T without materializing a transpose (contract last dims)
    s = lax.dot_general(q_ref[...], k_ref[...],
                        dimension_numbers=(((1,), (1,)), ((), ())),
                        preferred_element_type=jnp.float32)          # [TQ, TKV] f32
    s = s + bias_ref[...]                                            # additive mask

    m_prev = m_sc[...]
    m_new = jnp.maximum(m_prev, jnp.max(s, axis=-1, keepdims=True))
    alpha = jnp.exp(m_prev - m_new)
    p = jnp.exp(s - m_new)
    l_sc[...] = alpha * l_sc[...] + jnp.sum(p, axis=-1, keepdims=True)
    # p narrowed to bf16 -> native bf16 MXU matmul against bf16 V
    acc_sc[...] = alpha * acc_sc[...] + jnp.dot(
        p.astype(v_ref.dtype), v_ref[...], preferred_element_type=jnp.float32)
    m_sc[...] = m_new

    @pl.when(ki == pl.num_programs(3) - 1)
    def _():
        o_ref[...] = (acc_sc[...] *
                      pl.reciprocal(l_sc[...], approx=True)).astype(o_ref.dtype)


def pallas_attention(q, k, v, bias, head):
    """q, k, v: [B, S, head*128] bf16 (head h lives in columns h*128:(h+1)*128);
    bias: [B, 1, S] f32 additive mask -> [B, S, head*128] bf16."""
    B, S, _ = q.shape
    Dh = HEAD_DIM
    TQ = _pick_seq_tile(S, 256)    # small TQ: keeps [TQ,TKV] f32 score tile vreg-friendly
    TKV = _pick_seq_tile(S, 512)
    H = head

    q_spec = pl.BlockSpec((None, TQ, Dh), lambda b, h, qi, ki: (b, qi, h))
    k_spec = pl.BlockSpec((None, TKV, Dh), lambda b, h, qi, ki: (b, ki, h))
    v_spec = pl.BlockSpec((None, TKV, Dh), lambda b, h, qi, ki: (b, ki, h))
    bias_spec = pl.BlockSpec((None, 1, TKV), lambda b, h, qi, ki: (b, 0, ki))
    o_spec = pl.BlockSpec((None, TQ, Dh), lambda b, h, qi, ki: (b, qi, h))

    return pl.pallas_call(
        _flash_attn_kernel,
        out_shape=jax.ShapeDtypeStruct(q.shape, q.dtype),
        grid=(B, H, pl.cdiv(S, TQ), pl.cdiv(S, TKV)),
        in_specs=[q_spec, k_spec, v_spec, bias_spec],
        out_specs=o_spec,
        scratch_shapes=[pltpu.VMEM((TQ, 1), jnp.float32),    # running max m
                        pltpu.VMEM((TQ, 1), jnp.float32),    # running sum l
                        pltpu.VMEM((TQ, Dh), jnp.float32)],  # output accumulator
        compiler_params=pltpu.CompilerParams(
            dimension_semantics=("parallel", "parallel", "parallel", "arbitrary"),
            vmem_limit_bytes=_VMEM_LIMIT),
    )(q, k, v, bias)


# ---------------------------------------------------------------------------
# Parameter init (PyTorch nn.Linear-style uniform bounds)
# ---------------------------------------------------------------------------
def init_params(key, out_size):
    keys = jax.random.split(key, 8)

    def linear_init(kw, kb, fan_in, fan_out):
        bound = 1.0 / math.sqrt(fan_in)
        w = jax.random.uniform(kw, (fan_in, fan_out), jnp.float32, -bound, bound)
        b = jax.random.uniform(kb, (fan_out,), jnp.float32, -bound, bound)
        return w, b

    wv, bv = linear_init(keys[0], keys[1], IN_DIM, out_size)
    wk, bk = linear_init(keys[2], keys[3], IN_DIM, out_size)
    wq, bq = linear_init(keys[4], keys[5], IN_DIM, out_size)
    wm, bm = linear_init(keys[6], keys[7], out_size, out_size)
    return dict(wv=wv, bv=bv, wk=wk, bk=bk, wq=wq, bq=bq, wm=wm, bm=bm)


# ---------------------------------------------------------------------------
# MHAtt forward (glue in plain JAX, all heavy work in Pallas)
# ---------------------------------------------------------------------------
@functools.partial(jax.jit, static_argnames=("head", "self_attention"))
def mhatt_forward(params, v, k, q, mask, head, self_attention=False):
    """v, k, q: [B, S, 512] f32; mask: [B, 1, 1, S] bool (key-padding, constant over
    query positions / heads) -> [B, S, head*128] f32.
    self_attention=True: caller guarantees v, k, q are the same tensor."""
    B, S, _ = q.shape
    out_size = head * HEAD_DIM
    scale = jnp.float32(1.0 / math.sqrt(HEAD_DIM))

    # Fold the 1/sqrt(d_k) attention scale into the Q projection (in f32, then bf16).
    wq = (params["wq"] * scale).astype(COMPUTE_DTYPE)
    bq = params["bq"] * scale                                   # biases stay f32
    wk = params["wk"].astype(COMPUTE_DTYPE)
    wv = params["wv"].astype(COMPUTE_DTYPE)
    wm = params["wm"].astype(COMPUTE_DTYPE)

    if self_attention:
        # Single input DMA + one wide [TM,512]x[512,3N] bf16 MXU stream.
        x = q.astype(COMPUTE_DTYPE).reshape(B * S, IN_DIM)
        wqkv = jnp.concatenate([wq, wk, wv], axis=1)            # [512, 3N] bf16
        bqkv = jnp.concatenate([bq, params["bk"], params["bv"]], axis=0)
        q_p, k_p, v_p = pallas_qkv_proj_fused(x, wqkv, bqkv)
    else:
        q_p, k_p, v_p = pallas_qkv_proj(
            q.astype(COMPUTE_DTYPE).reshape(B * S, IN_DIM),
            k.astype(COMPUTE_DTYPE).reshape(B * S, IN_DIM),
            v.astype(COMPUTE_DTYPE).reshape(B * S, IN_DIM),
            wq, wk, wv, bq, params["bk"], params["bv"])

    # [B*S, H*128] -> [B, S, H*128]: metadata-only reshape; head h is the 128-lane
    # column group h — head slicing happens inside the attention BlockSpecs, so no
    # HBM transposes are needed before or after attention.
    q_p = q_p.reshape(B, S, out_size)
    k_p = k_p.reshape(B, S, out_size)
    v_p = v_p.reshape(B, S, out_size)

    # Key-padding mask -> additive f32 bias (0 / -1e9), lane-dense [B, 1, S].
    bias = jnp.where(mask.reshape(B, 1, S),
                     jnp.float32(-1.0e9), jnp.float32(0.0)).astype(jnp.float32)

    atted = pallas_attention(q_p, k_p, v_p, bias, head)         # bf16 [B,S,out_size]

    out = pallas_linear(atted.reshape(B * S, out_size), wm, params["bm"],
                        out_dtype=q.dtype)                      # f32 final output
    return out.reshape(B, S, out_size)


# ---------------------------------------------------------------------------
# Pure-JAX f32 reference for correctness check
# ---------------------------------------------------------------------------
def mhatt_reference(params, v, k, q, mask, head):
    B, S, _ = q.shape
    out_size = head * HEAD_DIM

    def proj(x, w, b):
        y = x.reshape(B * S, IN_DIM) @ w + b
        return jnp.transpose(y.reshape(B, S, head, HEAD_DIM), (0, 2, 1, 3))

    vh = proj(v, params["wv"], params["bv"])
    kh = proj(k, params["wk"], params["bk"])
    qh = proj(q, params["wq"], params["bq"])
    scores = jnp.einsum("bhqd,bhkd->bhqk", qh, kh) / math.sqrt(HEAD_DIM)
    scores = jnp.where(mask, -1.0e9, scores)                    # [B,1,1,S] broadcast
    p = jax.nn.softmax(scores, axis=-1)
    atted = jnp.einsum("bhqk,bhkd->bhqd", p, vh)
    atted = jnp.transpose(atted, (0, 2, 1, 3)).reshape(B * S, out_size)
    return (atted @ params["wm"] + params["bm"]).reshape(B, S, out_size)


if __name__ == "__main__":
    B, S = 2, 8
    head = 2
    out_size = head * HEAD_DIM  # 256 (module requires out_size == head * 128)

    key = jax.random.PRNGKey(0)
    kp, kv, kk, kq = jax.random.split(key, 4)

    params = init_params(kp, out_size)
    v = jax.random.normal(kv, (B, S, IN_DIM), jnp.float32)
    k = jax.random.normal(kk, (B, S, IN_DIM), jnp.float32)
    q = jax.random.normal(kq, (B, S, IN_DIM), jnp.float32)

    # key-padding style mask: batch 0 unmasked, batch 1 has last 2 positions masked
    mask = jnp.zeros((B, 1, 1, S), dtype=bool).at[1, :, :, S - 2:].set(True)

    # General (cross-attention) path: three distinct inputs.
    out = jax.block_until_ready(mhatt_forward(params, v, k, q, mask, head))
    ref = mhatt_reference(params, v, k, q, mask, head)
    assert out.shape == (B, S, out_size)
    assert jnp.allclose(out, ref, atol=5e-2, rtol=5e-2), (
        "cross-attn mismatch vs reference, max abs err = "
        f"{float(jnp.max(jnp.abs(out - ref)))}")

    # Self-attention fast path: q == k == v, single fused projection.
    out_sa = jax.block_until_ready(
        mhatt_forward(params, q, q, q, mask, head, self_attention=True))
    ref_sa = mhatt_reference(params, q, q, q, mask, head)
    assert jnp.allclose(out_sa, ref_sa, atol=5e-2, rtol=5e-2), (
        "self-attn mismatch vs reference, max abs err = "
        f"{float(jnp.max(jnp.abs(out_sa - ref_sa)))}")

    print("KERNEL_OK")
</pallas_src>

<mosaic_0001>
module attributes {stable_mosaic.version = 11 : i64} {
  func.func @_qkv_proj_kernel(%arg0: i32, %arg1: memref<16x512xbf16, #tpu.memory_space<vmem>>, %arg2: memref<16x512xbf16, #tpu.memory_space<vmem>>, %arg3: memref<16x512xbf16, #tpu.memory_space<vmem>>, %arg4: memref<512x256xbf16, #tpu.memory_space<vmem>>, %arg5: memref<512x256xbf16, #tpu.memory_space<vmem>>, %arg6: memref<512x256xbf16, #tpu.memory_space<vmem>>, %arg7: memref<1x256xf32, #tpu.memory_space<vmem>>, %arg8: memref<1x256xf32, #tpu.memory_space<vmem>>, %arg9: memref<1x256xf32, #tpu.memory_space<vmem>>, %arg10: memref<16x256xbf16, #tpu.memory_space<vmem>>, %arg11: memref<16x256xbf16, #tpu.memory_space<vmem>>, %arg12: memref<16x256xbf16, #tpu.memory_space<vmem>>) attributes {dimension_semantics = [#tpu.dimension_semantics<parallel>], iteration_bounds = array<i64: 1>, scalar_prefetch = 0 : i64, scratch_operands = 0 : i64, tpu.core_type = #tpu.core_type<tc>, window_params = [{transform_indices = @transform_0, window_bounds = array<i64: 16, 512>}, {transform_indices = @transform_1, window_bounds = array<i64: 16, 512>}, {transform_indices = @transform_2, window_bounds = array<i64: 16, 512>}, {pipeline_mode = #tpu.pipeline_mode<synchronous>, transform_indices = @transform_3, window_bounds = array<i64: 512, 256>}, {pipeline_mode = #tpu.pipeline_mode<synchronous>, transform_indices = @transform_4, window_bounds = array<i64: 512, 256>}, {pipeline_mode = #tpu.pipeline_mode<synchronous>, transform_indices = @transform_5, window_bounds = array<i64: 512, 256>}, {pipeline_mode = #tpu.pipeline_mode<synchronous>, transform_indices = @transform_6, window_bounds = array<i64: 1, 256>}, {pipeline_mode = #tpu.pipeline_mode<synchronous>, transform_indices = @transform_7, window_bounds = array<i64: 1, 256>}, {pipeline_mode = #tpu.pipeline_mode<synchronous>, transform_indices = @transform_8, window_bounds = array<i64: 1, 256>}, {transform_indices = @transform_9, window_bounds = array<i64: 16, 256>}, {transform_indices = @transform_10, window_bounds = array<i64: 16, 256>}, {transform_indices = @transform_11, window_bounds = array<i64: 16, 256>}]} {
    %c0 = arith.constant 0 : index
    %c0_0 = arith.constant 0 : index
    %0 = vector.load %arg1[%c0, %c0_0] : memref<16x512xbf16, #tpu.memory_space<vmem>>, vector<16x512xbf16>
    %c0_1 = arith.constant 0 : index
    %c0_2 = arith.constant 0 : index
    %1 = vector.load %arg4[%c0_1, %c0_2] : memref<512x256xbf16, #tpu.memory_space<vmem>>, vector<512x256xbf16>
    %cst = arith.constant dense<0.000000e+00> : vector<16x256xf32>
    %2 = tpu.matmul %0, %1, %cst {dimension_numbers = #tpu.dot_dimension_numbers<[1], [0], [0], [1], [0, 0, 1, 1], [], []>} : vector<16x512xbf16>, vector<512x256xbf16>, vector<16x256xf32> -> vector<16x256xf32>
    %c0_3 = arith.constant 0 : index
    %c0_4 = arith.constant 0 : index
    %3 = vector.load %arg7[%c0_3, %c0_4] : memref<1x256xf32, #tpu.memory_space<vmem>>, vector<1x256xf32>
    %4 = vector.broadcast %3 : vector<1x256xf32> to vector<16x256xf32>
    %5 = arith.addf %2, %4 : vector<16x256xf32>
    %6 = arith.truncf %5 : vector<16x256xf32> to vector<16x256xbf16>
    %c0_5 = arith.constant 0 : index
    %c0_6 = arith.constant 0 : index
    %7 = vector.load %arg10[%c0_5, %c0_6] : memref<16x256xbf16, #tpu.memory_space<vmem>>, vector<16x256xbf16>
    tpu.vector_store %arg10[%c0_5, %c0_6], %6 {strides = array<i32>} : memref<16x256xbf16, #tpu.memory_space<vmem>>, vector<16x256xbf16>,
    %c0_7 = arith.constant 0 : index
    %c0_8 = arith.constant 0 : index
    %8 = vector.load %arg2[%c0_7, %c0_8] : memref<16x512xbf16, #tpu.memory_space<vmem>>, vector<16x512xbf16>
    %c0_9 = arith.constant 0 : index
    %c0_10 = arith.constant 0 : index
    %9 = vector.load %arg5[%c0_9, %c0_10] : memref<512x256xbf16, #tpu.memory_space<vmem>>, vector<512x256xbf16>
    %cst_11 = arith.constant dense<0.000000e+00> : vector<16x256xf32>
    %10 = tpu.matmul %8, %9, %cst_11 {dimension_numbers = #tpu.dot_dimension_numbers<[1], [0], [0], [1], [0, 0, 1, 1], [], []>} : vector<16x512xbf16>, vector<512x256xbf16>, vector<16x256xf32> -> vector<16x256xf32>
    %c0_12 = arith.constant 0 : index
    %c0_13 = arith.constant 0 : index
    %11 = vector.load %arg8[%c0_12, %c0_13] : memref<1x256xf32, #tpu.memory_space<vmem>>, vector<1x256xf32>
    %12 = vector.broadcast %11 : vector<1x256xf32> to vector<16x256xf32>
    %13 = arith.addf %10, %12 : vector<16x256xf32>
    %14 = arith.truncf %13 : vector<16x256xf32> to vector<16x256xbf16>
    %c0_14 = arith.constant 0 : index
    %c0_15 = arith.constant 0 : index
    %15 = vector.load %arg11[%c0_14, %c0_15] : memref<16x256xbf16, #tpu.memory_space<vmem>>, vector<16x256xbf16>
    tpu.vector_store %arg11[%c0_14, %c0_15], %14 {strides = array<i32>} : memref<16x256xbf16, #tpu.memory_space<vmem>>, vector<16x256xbf16>,
    %c0_16 = arith.constant 0 : index
    %c0_17 = arith.constant 0 : index
    %16 = vector.load %arg3[%c0_16, %c0_17] : memref<16x512xbf16, #tpu.memory_space<vmem>>, vector<16x512xbf16>
    %c0_18 = arith.constant 0 : index
    %c0_19 = arith.constant 0 : index
    %17 = vector.load %arg6[%c0_18, %c0_19] : memref<512x256xbf16, #tpu.memory_space<vmem>>, vector<512x256xbf16>
    %cst_20 = arith.constant dense<0.000000e+00> : vector<16x256xf32>
    %18 = tpu.matmul %16, %17, %cst_20 {dimension_numbers = #tpu.dot_dimension_numbers<[1], [0], [0], [1], [0, 0, 1, 1], [], []>} : vector<16x512xbf16>, vector<512x256xbf16>, vector<16x256xf32> -> vector<16x256xf32>
    %c0_21 = arith.constant 0 : index
    %c0_22 = arith.constant 0 : index
    %19 = vector.load %arg9[%c0_21, %c0_22] : memref<1x256xf32, #tpu.memory_space<vmem>>, vector<1x256xf32>
    %20 = vector.broadcast %19 : vector<1x256xf32> to vector<16x256xf32>
    %21 = arith.addf %18, %20 : vector<16x256xf32>
    %22 = arith.truncf %21 : vector<16x256xf32> to vector<16x256xbf16>
    %c0_23 = arith.constant 0 : index
    %c0_24 = arith.constant 0 : index
    %23 = vector.load %arg12[%c0_23, %c0_24] : memref<16x256xbf16, #tpu.memory_space<vmem>>, vector<16x256xbf16>
    tpu.vector_store %arg12[%c0_23, %c0_24], %22 {strides = array<i32>} : memref<16x256xbf16, #tpu.memory_space<vmem>>, vector<16x256xbf16>,
    return
  }
  func.func @transform_0(%arg0: i32) -> (i32, i32) {
    %c0_i32 = arith.constant 0 : i32
    %c0_i32_0 = arith.constant 0 : i32
    return %arg0, %c0_i32 : i32, i32
  }
  func.func @transform_1(%arg0: i32) -> (i32, i32) {
    %c0_i32 = arith.constant 0 : i32
    %c0_i32_0 = arith.constant 0 : i32
    return %arg0, %c0_i32 : i32, i32
  }
  func.func @transform_2(%arg0: i32) -> (i32, i32) {
    %c0_i32 = arith.constant 0 : i32
    %c0_i32_0 = arith.constant 0 : i32
    return %arg0, %c0_i32 : i32, i32
  }
  func.func @transform_3(%arg0: i32) -> (i32, i32) {
    %c0_i32 = arith.constant 0 : i32
    %c0_i32_0 = arith.constant 0 : i32
    %c0_i32_1 = arith.constant 0 : i32
    return %c0_i32, %c0_i32_0 : i32, i32
  }
  func.func @transform_4(%arg0: i32) -> (i32, i32) {
    %c0_i32 = arith.constant 0 : i32
    %c0_i32_0 = arith.constant 0 : i32
    %c0_i32_1 = arith.constant 0 : i32
    return %c0_i32, %c0_i32_0 : i32, i32
  }
  func.func @transform_5(%arg0: i32) -> (i32, i32) {
    %c0_i32 = arith.constant 0 : i32
    %c0_i32_0 = arith.constant 0 : i32
    %c0_i32_1 = arith.constant 0 : i32
    return %c0_i32, %c0_i32_0 : i32, i32
  }
  func.func @transform_6(%arg0: i32) -> (i32, i32) {
    %c0_i32 = arith.constant 0 : i32
    %c0_i32_0 = arith.constant 0 : i32
    %c0_i32_1 = arith.constant 0 : i32
    return %c0_i32, %c0_i32_0 : i32, i32
  }
  func.func @transform_7(%arg0: i32) -> (i32, i32) {
    %c0_i32 = arith.constant 0 : i32
    %c0_i32_0 = arith.constant 0 : i32
    %c0_i32_1 = arith.constant 0 : i32
    return %c0_i32, %c0_i32_0 : i32, i32
  }
  func.func @transform_8(%arg0: i32) -> (i32, i32) {
    %c0_i32 = arith.constant 0 : i32
    %c0_i32_0 = arith.constant 0 : i32
    %c0_i32_1 = arith.constant 0 : i32
    return %c0_i32, %c0_i32_0 : i32, i32
  }
  func.func @transform_9(%arg0: i32) -> (i32, i32) {
    %c0_i32 = arith.constant 0 : i32
    %c0_i32_0 = arith.constant 0 : i32
    return %arg0, %c0_i32 : i32, i32
  }
  func.func @transform_10(%arg0: i32) -> (i32, i32) {
    %c0_i32 = arith.constant 0 : i32
    %c0_i32_0 = arith.constant 0 : i32
    return %arg0, %c0_i32 : i32, i32
  }
  func.func @transform_11(%arg0: i32) -> (i32, i32) {
    %c0_i32 = arith.constant 0 : i32
    %c0_i32_0 = arith.constant 0 : i32
    return %arg0, %c0_i32 : i32, i32
  }
}

module attributes {stable_mosaic.version = 11 : i64} {
  func.func @_flash_attn_kernel(%arg0: i32, %arg1: i32, %arg2: i32, %arg3: i32, %arg4: memref<1x8x128xbf16, #tpu.memory_space<vmem>>, %arg5: memref<1x8x128xbf16, #tpu.memory_space<vmem>>, %arg6: memref<1x8x128xbf16, #tpu.memory_space<vmem>>, %arg7: memref<1x1x8xf32, #tpu.memory_space<vmem>>, %arg8: memref<1x8x128xbf16, #tpu.memory_space<vmem>>, %arg9: memref<8x1xf32, #tpu.memory_space<vmem>>, %arg10: memref<8x1xf32, #tpu.memory_space<vmem>>, %arg11: memref<8x128xf32, #tpu.memory_space<vmem>>) attributes {dimension_semantics = [#tpu.dimension_semantics<parallel>, #tpu.dimension_semantics<parallel>, #tpu.dimension_semantics<parallel>, #tpu.dimension_semantics<arbitrary>], iteration_bounds = array<i64: 2, 2, 1, 1>, scalar_prefetch = 0 : i64, scratch_operands = 3 : i64, tpu.core_type = #tpu.core_type<tc>, window_params = [{transform_indices = @transform_0, window_bounds = array<i64: 1, 8, 128>}, {transform_indices = @transform_1, window_bounds = array<i64: 1, 8, 128>}, {transform_indices = @transform_2, window_bounds = array<i64: 1, 8, 128>}, {transform_indices = @transform_3, window_bounds = array<i64: 1, 1, 8>}, {transform_indices = @transform_4, window_bounds = array<i64: 1, 8, 128>}]} {
    %c0_i32 = arith.constant 0 : i32
    %0 = arith.cmpi eq, %arg3, %c0_i32 : i32
    %1 = arith.extui %0 : i1 to i32
    %c0_i32_0 = arith.constant 0 : i32
    %2 = arith.cmpi ne, %1, %c0_i32_0 : i32
    scf.if %2 {
      %cst_29 = arith.constant 0xFF800000 : f32
      %40 = vector.broadcast %cst_29 : f32 to vector<8x1xf32>
      %c0_30 = arith.constant 0 : index
      %c0_31 = arith.constant 0 : index
      %41 = vector.load %arg9[%c0_30, %c0_31] : memref<8x1xf32, #tpu.memory_space<vmem>>, vector<8x1xf32>
      tpu.vector_store %arg9[%c0_30, %c0_31], %40 {strides = array<i32>} : memref<8x1xf32, #tpu.memory_space<vmem>>, vector<8x1xf32>,
      %cst_32 = arith.constant 0.000000e+00 : f32
      %42 = vector.broadcast %cst_32 : f32 to vector<8x1xf32>
      %c0_33 = arith.constant 0 : index
      %c0_34 = arith.constant 0 : index
      %43 = vector.load %arg10[%c0_33, %c0_34] : memref<8x1xf32, #tpu.memory_space<vmem>>, vector<8x1xf32>
      tpu.vector_store %arg10[%c0_33, %c0_34], %42 {strides = array<i32>} : memref<8x1xf32, #tpu.memory_space<vmem>>, vector<8x1xf32>,
      %cst_35 = arith.constant 0.000000e+00 : f32
      %44 = vector.broadcast %cst_35 : f32 to vector<8x128xf32>
      %c0_36 = arith.constant 0 : index
      %c0_37 = arith.constant 0 : index
      %45 = vector.load %arg11[%c0_36, %c0_37] : memref<8x128xf32, #tpu.memory_space<vmem>>, vector<8x128xf32>
      tpu.vector_store %arg11[%c0_36, %c0_37], %44 {strides = array<i32>} : memref<8x128xf32, #tpu.memory_space<vmem>>, vector<8x128xf32>,
    } else {
    }
    %c0 = arith.constant 0 : index
    %c0_1 = arith.constant 0 : index
    %c0_2 = arith.constant 0 : index
    %3 = vector.load %arg4[%c0, %c0_1, %c0_2] : memref<1x8x128xbf16, #tpu.memory_space<vmem>>, vector<1x8x128xbf16>
    %4 = vector.shape_cast %3 : vector<1x8x128xbf16> to vector<8x128xbf16>
    %c0_3 = arith.constant 0 : index
    %c0_4 = arith.constant 0 : index
    %c0_5 = arith.constant 0 : index
    %5 = vector.load %arg5[%c0_3, %c0_4, %c0_5] : memref<1x8x128xbf16, #tpu.memory_space<vmem>>, vector<1x8x128xbf16>
    %6 = vector.shape_cast %5 : vector<1x8x128xbf16> to vector<8x128xbf16>
    %cst = arith.constant dense<0.000000e+00> : vector<8x8xf32>
    %7 = tpu.matmul %4, %6, %cst {dimension_numbers = #tpu.dot_dimension_numbers<[1], [1], [0], [0], [0, 0, 1, 0], [], []>} : vector<8x128xbf16>, vector<8x128xbf16>, vector<8x8xf32> -> vector<8x8xf32>
    %c0_6 = arith.constant 0 : index
    %c0_7 = arith.constant 0 : index
    %c0_8 = arith.constant 0 : index
    %8 = vector.load %arg7[%c0_6, %c0_7, %c0_8] : memref<1x1x8xf32, #tpu.memory_space<vmem>>, vector<1x1x8xf32>
    %9 = vector.shape_cast %8 : vector<1x1x8xf32> to vector<1x8xf32>
    %10 = vector.broadcast %9 : vector<1x8xf32> to vector<8x8xf32>
    %11 = arith.addf %7, %10 : vector<8x8xf32>
    %c0_9 = arith.constant 0 : index
    %c0_10 = arith.constant 0 : index
    %12 = vector.load %arg9[%c0_9, %c0_10] : memref<8x1xf32, #tpu.memory_space<vmem>>, vector<8x1xf32>
    %cst_11 = arith.constant dense<0xFF800000> : vector<8xf32>
    %13 = vector.multi_reduction <maximumf>, %11, %cst_11 [1] : vector<8x8xf32> to vector<8xf32>
    %14 = vector.shape_cast %13 : vector<8xf32> to vector<8x1xf32>
    %15 = arith.maximumf %12, %14 : vector<8x1xf32>
    %16 = arith.subf %12, %15 : vector<8x1xf32>
    %17 = math.exp %16 : vector<8x1xf32>
    %18 = vector.broadcast %15 : vector<8x1xf32> to vector<8x8xf32>
    %19 = arith.subf %11, %18 : vector<8x8xf32>
    %20 = math.exp %19 : vector<8x8xf32>
    %c0_12 = arith.constant 0 : index
    %c0_13 = arith.constant 0 : index
    %21 = vector.load %arg10[%c0_12, %c0_13] : memref<8x1xf32, #tpu.memory_space<vmem>>, vector<8x1xf32>
    %22 = arith.mulf %17, %21 : vector<8x1xf32>
    %cst_14 = arith.constant dense<0.000000e+00> : vector<8xf32>
    %23 = vector.multi_reduction <add>, %20, %cst_14 [1] : vector<8x8xf32> to vector<8xf32>
    %24 = vector.shape_cast %23 : vector<8xf32> to vector<8x1xf32>
    %25 = arith.addf %22, %24 : vector<8x1xf32>
    %c0_15 = arith.constant 0 : index
    %c0_16 = arith.constant 0 : index
    %26 = vector.load %arg10[%c0_15, %c0_16] : memref<8x1xf32, #tpu.memory_space<vmem>>, vector<8x1xf32>
    tpu.vector_store %arg10[%c0_15, %c0_16], %25 {strides = array<i32>} : memref<8x1xf32, #tpu.memory_space<vmem>>, vector<8x1xf32>,
    %c0_17 = arith.constant 0 : index
    %c0_18 = arith.constant 0 : index
    %27 = vector.load %arg11[%c0_17, %c0_18] : memref<8x128xf32, #tpu.memory_space<vmem>>, vector<8x128xf32>
    %28 = vector.broadcast %17 : vector<8x1xf32> to vector<8x128xf32>
    %29 = arith.mulf %28, %27 : vector<8x128xf32>
    %30 = arith.truncf %20 : vector<8x8xf32> to vector<8x8xbf16>
    %c0_19 = arith.constant 0 : index
    %c0_20 = arith.constant 0 : index
    %c0_21 = arith.constant 0 : index
    %31 = vector.load %arg6[%c0_19, %c0_20, %c0_21] : memref<1x8x128xbf16, #tpu.memory_space<vmem>>, vector<1x8x128xbf16>
    %32 = vector.shape_cast %31 : vector<1x8x128xbf16> to vector<8x128xbf16>
    %cst_22 = arith.constant dense<0.000000e+00> : vector<8x128xf32>
    %33 = tpu.matmul %30, %32, %cst_22 {dimension_numbers = #tpu.dot_dimension_numbers<[1], [0], [0], [1], [0, 0, 1, 1], [], []>} : vector<8x8xbf16>, vector<8x128xbf16>, vector<8x128xf32> -> vector<8x128xf32>
    %34 = arith.addf %29, %33 : vector<8x128xf32>
    %c0_23 = arith.constant 0 : index
    %c0_24 = arith.constant 0 : index
    %35 = vector.load %arg11[%c0_23, %c0_24] : memref<8x128xf32, #tpu.memory_space<vmem>>, vector<8x128xf32>
    tpu.vector_store %arg11[%c0_23, %c0_24], %34 {strides = array<i32>} : memref<8x128xf32, #tpu.memory_space<vmem>>, vector<8x128xf32>,
    %c0_25 = arith.constant 0 : index
    %c0_26 = arith.constant 0 : index
    %36 = vector.load %arg9[%c0_25, %c0_26] : memref<8x1xf32, #tpu.memory_space<vmem>>, vector<8x1xf32>
    tpu.vector_store %arg9[%c0_25, %c0_26], %15 {strides = array<i32>} : memref<8x1xf32, #tpu.memory_space<vmem>>, vector<8x1xf32>,
    %c0_i32_27 = arith.constant 0 : i32
    %37 = arith.cmpi eq, %arg3, %c0_i32_27 : i32
    %38 = arith.extui %37 : i1 to i32
    %c0_i32_28 = arith.constant 0 : i32
    %39 = arith.cmpi ne, %38, %c0_i32_28 : i32
    scf.if %39 {
      %c0_29 = arith.constant 0 : index
      %c0_30 = arith.constant 0 : index
      %40 = vector.load %arg11[%c0_29, %c0_30] : memref<8x128xf32, #tpu.memory_space<vmem>>, vector<8x128xf32>
      %c0_31 = arith.constant 0 : index
      %c0_32 = arith.constant 0 : index
      %41 = vector.load %arg10[%c0_31, %c0_32] : memref<8x1xf32, #tpu.memory_space<vmem>>, vector<8x1xf32>
      %42 = tpu.reciprocal %41 {approx = true} : vector<8x1xf32> -> vector<8x1xf32>
      %43 = vector.broadcast %42 : vector<8x1xf32> to vector<8x128xf32>
      %44 = arith.mulf %40, %43 : vector<8x128xf32>
      %45 = arith.truncf %44 : vector<8x128xf32> to vector<8x128xbf16>
      %c0_33 = arith.constant 0 : index
      %c0_34 = arith.constant 0 : index
      %c0_35 = arith.constant 0 : index
      %46 = vector.load %arg8[%c0_33, %c0_34, %c0_35] : memref<1x8x128xbf16, #tpu.memory_space<vmem>>, vector<1x8x128xbf16>
      %47 = vector.shape_cast %46 : vector<1x8x128xbf16> to vector<8x128xbf16>
      %48 = vector.shape_cast %45 : vector<8x128xbf16> to vector<1x8x128xbf16>
      tpu.vector_store %arg8[%c0_33, %c0_34, %c0_35], %48 {strides = array<i32>} : memref<1x8x128xbf16, #tpu.memory_space<vmem>>, vector<1x8x128xbf16>,
    } else {
    }
    return
  }
  func.func @transform_0(%arg0: i32, %arg1: i32, %arg2: i32, %arg3: i32) -> (i32, i32, i32) {
    %c0_i32 = arith.constant 0 : i32
    return %arg0, %arg2, %arg1 : i32, i32, i32
  }
  func.func @transform_1(%arg0: i32, %arg1: i32, %arg2: i32, %arg3: i32) -> (i32, i32, i32) {
    %c0_i32 = arith.constant 0 : i32
    return %arg0, %arg3, %arg1 : i32, i32, i32
  }
  func.func @transform_2(%arg0: i32, %arg1: i32, %arg2: i32, %arg3: i32) -> (i32, i32, i32) {
    %c0_i32 = arith.constant 0 : i32
    return %arg0, %arg3, %arg1 : i32, i32, i32
  }
  func.func @transform_3(%arg0: i32, %arg1: i32, %arg2: i32, %arg3: i32) -> (i32, i32, i32) {
    %c0_i32 = arith.constant 0 : i32
    %c0_i32_0 = arith.constant 0 : i32
    return %arg0, %c0_i32, %arg3 : i32, i32, i32
  }
  func.func @transform_4(%arg0: i32, %arg1: i32, %arg2: i32, %arg3: i32) -> (i32, i32, i32) {
    %c0_i32 = arith.constant 0 : i32
    return %arg0, %arg2, %arg1 : i32, i32, i32
  }
}

module attributes {stable_mosaic.version = 11 : i64} {
  func.func @_linear_kernel(%arg0: i32, %arg1: memref<16x256xbf16, #tpu.memory_space<vmem>>, %arg2: memref<256x256xbf16, #tpu.memory_space<vmem>>, %arg3: memref<1x256xf32, #tpu.memory_space<vmem>>, %arg4: memref<16x256xf32, #tpu.memory_space<vmem>>) attributes {dimension_semantics = [#tpu.dimension_semantics<parallel>], iteration_bounds = array<i64: 1>, scalar_prefetch = 0 : i64, scratch_operands = 0 : i64, tpu.core_type = #tpu.core_type<tc>, window_params = [{transform_indices = @transform_0, window_bounds = array<i64: 16, 256>}, {pipeline_mode = #tpu.pipeline_mode<synchronous>, transform_indices = @transform_1, window_bounds = array<i64: 256, 256>}, {pipeline_mode = #tpu.pipeline_mode<synchronous>, transform_indices = @transform_2, window_bounds = array<i64: 1, 256>}, {transform_indices = @transform_3, window_bounds = array<i64: 16, 256>}]} {
    %c0 = arith.constant 0 : index
    %c0_0 = arith.constant 0 : index
    %0 = vector.load %arg1[%c0, %c0_0] : memref<16x256xbf16, #tpu.memory_space<vmem>>, vector<16x256xbf16>
    %c0_1 = arith.constant 0 : index
    %c0_2 = arith.constant 0 : index
    %1 = vector.load %arg2[%c0_1, %c0_2] : memref<256x256xbf16, #tpu.memory_space<vmem>>, vector<256x256xbf16>
    %cst = arith.constant dense<0.000000e+00> : vector<16x256xf32>
    %2 = tpu.matmul %0, %1, %cst {dimension_numbers = #tpu.dot_dimension_numbers<[1], [0], [0], [1], [0, 0, 1, 1], [], []>} : vector<16x256xbf16>, vector<256x256xbf16>, vector<16x256xf32> -> vector<16x256xf32>
    %c0_3 = arith.constant 0 : index
    %c0_4 = arith.constant 0 : index
    %3 = vector.load %arg3[%c0_3, %c0_4] : memref<1x256xf32, #tpu.memory_space<vmem>>, vector<1x256xf32>
    %4 = vector.broadcast %3 : vector<1x256xf32> to vector<16x256xf32>
    %5 = arith.addf %2, %4 : vector<16x256xf32>
    %c0_5 = arith.constant 0 : index
    %c0_6 = arith.constant 0 : index
    %6 = vector.load %arg4[%c0_5, %c0_6] : memref<16x256xf32, #tpu.memory_space<vmem>>, vector<16x256xf32>
    tpu.vector_store %arg4[%c0_5, %c0_6], %5 {strides = array<i32>} : memref<16x256xf32, #tpu.memory_space<vmem>>, vector<16x256xf32>,
    return
  }
  func.func @transform_0(%arg0: i32) -> (i32, i32) {
    %c0_i32 = arith.constant 0 : i32
    %c0_i32_0 = arith.constant 0 : i32
    return %arg0, %c0_i32 : i32, i32
  }
  func.func @transform_1(%arg0: i32) -> (i32, i32) {
    %c0_i32 = arith.constant 0 : i32
    %c0_i32_0 = arith.constant 0 : i32
    %c0_i32_1 = arith.constant 0 : i32
    return %c0_i32, %c0_i32_0 : i32, i32
  }
  func.func @transform_2(%arg0: i32) -> (i32, i32) {
    %c0_i32 = arith.constant 0 : i32
    %c0_i32_0 = arith.constant 0 : i32
    %c0_i32_1 = arith.constant 0 : i32
    return %c0_i32, %c0_i32_0 : i32, i32
  }
  func.func @transform_3(%arg0: i32) -> (i32, i32) {
    %c0_i32 = arith.constant 0 : i32
    %c0_i32_0 = arith.constant 0 : i32
    return %arg0, %c0_i32 : i32, i32
  }
}

</mosaic_0001>

<llo_original>
// kernel: mhatt_forward.4
$region0: #{mhatt_forward.4}
  #allocation0 [shape = 'u32[]', space=smem, size = 0x4, offset = 0x4, fixed_abs, tag = 'smem constant byte address 0x4 - core index']
  #allocation1 [shape = 'u32[144,128]{1,0:T(1,128)}', space=vmem, size = 0x12000, scoped, tag = 'internal scratch']
  #allocation2 [shape = 'f32[8,1]{1,0:T(8,128)}', space=vmem, size = 0x1000, scoped, tag = 'scratch operand']
  #allocation3 [shape = 'f32[8,1]{1,0:T(8,128)}', space=vmem, size = 0x1000, scoped, tag = 'scratch operand']
  #allocation4 [shape = 'f32[8,128]{1,0:T(8,128)}', space=vmem, size = 0x1000, scoped, tag = 'scratch operand']
  %s0 = inlined_call_operand.vmem [shape: bf16[2,8,256], index: 0, kind: input, shape index: {}]
  %s1 = inlined_call_operand.vmem [shape: bf16[2,8,256], index: 1, kind: input, shape index: {}]
  %s2 = inlined_call_operand.vmem [shape: bf16[2,8,256], index: 2, kind: input, shape index: {}]
  %s3 = inlined_call_operand.vmem [shape: f32[2,1,8], index: 3, kind: input, shape index: {}]
  %s4 = inlined_call_operand.vmem [shape: bf16[2,8,256], index: 4, kind: output, shape index: {}]
  %s5 = sld [smem:[#allocation0]]
  $region57: #{mhatt_forward.4} parent=0
    _
  %s7 = ssub.s32 1, %s5
  %s8 = scalar_select 0, %s7, %s5
  loop: start=0, step=1, limit=6
  $region2: #{mhatt_forward.4} parent=0 // loop_pre_header
    _
  $region3: #{mhatt_forward.4} parent=0 // loop_header
    %s10 = sphi 0, %s14
    %p11 = scmp.ge.s32.totalorder %s10, 6
    %s17 = sphi 0, %s43
    %s18 = sphi 0, %s39
    %s19 = sphi 0, %s35
    %s20 = sphi 0, %s31
    %s21 = sphi 0, %s17
    %s22 = sphi 0, %s18
    %s23 = sphi 0, %s19
    %s24 = sphi 0, %s20
    %s25 = sphi 0, %s21
    %s26 = sphi 0, %s22
    %s27 = sphi 0, %s23
    %s28 = sphi 0, %s24
    %s50 = sphi 0, %s52
    %s53 = sphi 0, %s50
    %s54 = sphi 0, %s53
    %s70 = sphi 0, %s54
    %s80 = sphi 0, %s82
    %s83 = sphi 0, %s80
    %s84 = sphi 0, %s83
    %s100 = sphi 0, %s84
    %s110 = sphi 0, %s112
    %s113 = sphi 0, %s110
    %s114 = sphi 0, %s113
    %s130 = sphi 0, %s114
    %s138 = sphi 0, %s140
    %s141 = sphi 0, %s138
    %s142 = sphi 0, %s141
    %s158 = sphi 0, %s142
    %s168 = sphi 0, %s170
    %s171 = sphi 0, %s168
    %s172 = sphi 0, %s171
    %s188 = sphi 0, %s172
  $region4: #{mhatt_forward.4} parent=0 // loop_header_branch
    %13 = sbr.rel (%p11) target = $region8
  $region5: #{mhatt_forward.4} parent=0 // loop_body
    %s15 = ssub.s32 %s10, 1
    %s16 = ssub.s32 %s10, 2
    %s29 = sadd.s32 1, %s20
    %p30 = scmp.ge.s32.totalorder %s29, 1
    %s31 = scalar_select %p30, 0, %s29
    %s32 = sadd.s32 1, %s19
    %s33 = scalar_select %p30, %s32, %s19
    %p34 = scmp.ge.s32.totalorder %s33, 1
    %s35 = scalar_select %p34, 0, %s33
    %s36 = sadd.s32 1, %s18
    %s37 = scalar_select %p34, %s36, %s18
    %p38 = scmp.ge.s32.totalorder %s37, 2
    %s39 = scalar_select %p38, 0, %s37
    %s40 = sadd.s32 1, %s17
    %s41 = scalar_select %p38, %s40, %s17
    %p42 = scmp.ge.s32.totalorder %s41, 2
    %s43 = scalar_select %p42, 0, %s41
    %s44 = ssub.s32 %s17, %s43
    %s45 = ssub.s32 %s19, %s35
    %s46 = sor.u32 %s44, %s45
    %s47 = ssub.s32 %s18, %s39
    %s48 = sor.u32 %s46, %s47
    %p49 = scmp.eq.s32.totalorder %s48, 0
    %s51 = sadd.s32 %s50, 1
    %s52 = scalar_select %p49, %s50, %s51
    %p55 = pneg %p49
    %p56 = scmp.eq.s32.totalorder %s10, 3
    %p57 = por %p55, %p56
    %p58 = scmp.ne.s32.totalorder %s50, %s53
    %p59 = scmp.eq.s32.totalorder %s10, 0
    %p60 = por %p58, %p59
    %p61 = scmp.ne.s32.totalorder %s50, %s53
    %p62 = scmp.eq.s32.totalorder %s15, 3
    %p63 = por %p61, %p62
    %p64 = scmp.ne.s32.totalorder %s53, %s54
    %p65 = scmp.eq.s32.totalorder %s15, 0
    %p66 = por %p64, %p65
    %p67 = scmp.ne.s32.totalorder %s53, %s54
    %p68 = scmp.eq.s32.totalorder %s16, 3
    %p69 = por %p67, %p68
    %p71 = scmp.ne.s32.totalorder %s54, %s70
    %p72 = scmp.eq.s32.totalorder %s16, 0
    %p73 = por %p71, %p72
    %s74 = ssub.s32 %s17, %s43
    %s75 = ssub.s32 %s20, %s31
    %s76 = sor.u32 %s74, %s75
    %s77 = ssub.s32 %s18, %s39
    %s78 = sor.u32 %s76, %s77
    %p79 = scmp.eq.s32.totalorder %s78, 0
    %s81 = sadd.s32 %s80, 1
    %s82 = scalar_select %p79, %s80, %s81
    %p85 = pneg %p79
    %p86 = scmp.eq.s32.totalorder %s10, 3
    %p87 = por %p85, %p86
    %p88 = scmp.ne.s32.totalorder %s80, %s83
    %p89 = scmp.eq.s32.totalorder %s10, 0
    %p90 = por %p88, %p89
    %p91 = scmp.ne.s32.totalorder %s80, %s83
    %p92 = scmp.eq.s32.totalorder %s15, 3
    %p93 = por %p91, %p92
    %p94 = scmp.ne.s32.totalorder %s83, %s84
    %p95 = scmp.eq.s32.totalorder %s15, 0
    %p96 = por %p94, %p95
    %p97 = scmp.ne.s32.totalorder %s83, %s84
    %p98 = scmp.eq.s32.totalorder %s16, 3
    %p99 = por %p97, %p98
    %p101 = scmp.ne.s32.totalorder %s84, %s100
    %p102 = scmp.eq.s32.totalorder %s16, 0
    %p103 = por %p101, %p102
    %s104 = ssub.s32 %s17, %s43
    %s105 = ssub.s32 %s20, %s31
    %s106 = sor.u32 %s104, %s105
    %s107 = ssub.s32 %s18, %s39
    %s108 = sor.u32 %s106, %s107
    %p109 = scmp.eq.s32.totalorder %s108, 0
    %s111 = sadd.s32 %s110, 1
    %s112 = scalar_select %p109, %s110, %s111
    %p115 = pneg %p109
    %p116 = scmp.eq.s32.totalorder %s10, 3
    %p117 = por %p115, %p116
    %p118 = scmp.ne.s32.totalorder %s110, %s113
    %p119 = scmp.eq.s32.totalorder %s10, 0
    %p120 = por %p118, %p119
    %p121 = scmp.ne.s32.totalorder %s110, %s113
    %p122 = scmp.eq.s32.totalorder %s15, 3
    %p123 = por %p121, %p122
    %p124 = scmp.ne.s32.totalorder %s113, %s114
    %p125 = scmp.eq.s32.totalorder %s15, 0
    %p126 = por %p124, %p125
    %p127 = scmp.ne.s32.totalorder %s113, %s114
    %p128 = scmp.eq.s32.totalorder %s16, 3
    %p129 = por %p127, %p128
    %p131 = scmp.ne.s32.totalorder %s114, %s130
    %p132 = scmp.eq.s32.totalorder %s16, 0
    %p133 = por %p131, %p132
    %s134 = ssub.s32 %s17, %s43
    %s135 = ssub.s32 %s20, %s31
    %s136 = sor.u32 %s134, %s135
    %p137 = scmp.eq.s32.totalorder %s136, 0
    %s139 = sadd.s32 %s138, 1
    %s140 = scalar_select %p137, %s138, %s139
    %p143 = pneg %p137
    %p144 = scmp.eq.s32.totalorder %s10, 3
    %p145 = por %p143, %p144
    %p146 = scmp.ne.s32.totalorder %s138, %s141
    %p147 = scmp.eq.s32.totalorder %s10, 0
    %p148 = por %p146, %p147
    %p149 = scmp.ne.s32.totalorder %s138, %s141
    %p150 = scmp.eq.s32.totalorder %s15, 3
    %p151 = por %p149, %p150
    %p152 = scmp.ne.s32.totalorder %s141, %s142
    %p153 = scmp.eq.s32.totalorder %s15, 0
    %p154 = por %p152, %p153
    %p155 = scmp.ne.s32.totalorder %s141, %s142
    %p156 = scmp.eq.s32.totalorder %s16, 3
    %p157 = por %p155, %p156
    %p159 = scmp.ne.s32.totalorder %s142, %s158
    %p160 = scmp.eq.s32.totalorder %s16, 0
    %p161 = por %p159, %p160
    %s162 = ssub.s32 %s17, %s43
    %s163 = ssub.s32 %s19, %s35
    %s164 = sor.u32 %s162, %s163
    %s165 = ssub.s32 %s18, %s39
    %s166 = sor.u32 %s164, %s165
    %p167 = scmp.eq.s32.totalorder %s166, 0
    %s169 = sadd.s32 %s168, 1
    %s170 = scalar_select %p167, %s168, %s169
    %p173 = pneg %p167
    %p174 = scmp.eq.s32.totalorder %s10, 3
    %p175 = por %p173, %p174
    %p176 = scmp.ne.s32.totalorder %s168, %s171
    %p177 = scmp.eq.s32.totalorder %s10, 0
    %p178 = por %p176, %p177
    %p179 = scmp.ne.s32.totalorder %s168, %s171
    %p180 = scmp.eq.s32.totalorder %s15, 3
    %p181 = por %p179, %p180
    %p182 = scmp.ne.s32.totalorder %s171, %s172
    %p183 = scmp.eq.s32.totalorder %s15, 0
    %p184 = por %p182, %p183
    %p185 = scmp.ne.s32.totalorder %s171, %s172
    %p186 = scmp.eq.s32.totalorder %s16, 3
    %p187 = por %p185, %p186
    %p189 = scmp.ne.s32.totalorder %s172, %s188
    %p190 = scmp.eq.s32.totalorder %s16, 0
    %p191 = por %p189, %p190
    %p192 = scmp.le.s32.totalorder 1, %s10
    %p193 = scmp.lt.s32.totalorder %s10, 5
    %p194 = pnand %p192, %p193
    %p195 = pneg %p194
    // Predicated region
    $region9: #{mhatt_forward.4} parent=5 // pred_check
      _
    $region10: #{mhatt_forward.4} parent=5 // pred_check_branch
      %197 = sbr.rel (%p194) target = $region12
    $region11: #{mhatt_forward.4} parent=5 // pred_region
      %s198 = ssub.s32 %s10, 1
    $region12: #{mhatt_forward.4} parent=5 // pred_fallthru
      _
    %p199 = scmp.lt.s32.totalorder %s10, 4
    // Predicated region
    $region13: #{mhatt_forward.4} parent=5 // pred_check
      %p200 = pneg %p199
    $region14: #{mhatt_forward.4} parent=5 // pred_check_branch
      %202 = sbr.rel (%p200) target = $region16
    $region15: #{mhatt_forward.4} parent=5 // pred_region
      // Predicated region
      $region17: #{mhatt_forward.4} parent=15 // pred_check
        %p203 = pneg %p60
      $region18: #{mhatt_forward.4} parent=15 // pred_check_branch
        %205 = sbr.rel (%p203) target = $region20
      $region19: #{mhatt_forward.4} parent=15 // pred_region
        %p206 = scmp.lt.s32.totalorder %s17, 1
        %s207 = scalar_select %p206, %s17, 1
        %p208 = scmp.lt.s32.totalorder %s19, 0
        %s209 = scalar_select %p208, %s19, 0
        %p210 = scmp.lt.s32.totalorder %s18, 1
        %s211 = scalar_select %p210, %s18, 1
        %s212 = smul.addr %s209, 2
        %s213 = sadd.s32 %s211, %s212
        %s214 = smul.addr %s207, 2
        %s215 = sadd.s32 %s213, %s214
        %s216 = smul.addr %s215, 4
        %s217 = scalar_lea.vmem %s0, %s216
      $region20: #{mhatt_forward.4} parent=15 // pred_fallthru
        _
      // Predicated region
      $region21: #{mhatt_forward.4} parent=15 // pred_check
        %p218 = pneg %p90
      $region22: #{mhatt_forward.4} parent=15 // pred_check_branch
        %220 = sbr.rel (%p218) target = $region24
      $region23: #{mhatt_forward.4} parent=15 // pred_region
        %p221 = scmp.lt.s32.totalorder %s17, 1
        %s222 = scalar_select %p221, %s17, 1
        %p223 = scmp.lt.s32.totalorder %s20, 0
        %s224 = scalar_select %p223, %s20, 0
        %p225 = scmp.lt.s32.totalorder %s18, 1
        %s226 = scalar_select %p225, %s18, 1
        %s227 = smul.addr %s224, 2
        %s228 = sadd.s32 %s226, %s227
        %s229 = smul.addr %s222, 2
        %s230 = sadd.s32 %s228, %s229
        %s231 = smul.addr %s230, 4
        %s232 = scalar_lea.vmem %s1, %s231
      $region24: #{mhatt_forward.4} parent=15 // pred_fallthru
        _
      // Predicated region
      $region25: #{mhatt_forward.4} parent=15 // pred_check
        %p233 = pneg %p120
      $region26: #{mhatt_forward.4} parent=15 // pred_check_branch
        %235 = sbr.rel (%p233) target = $region28
      $region27: #{mhatt_forward.4} parent=15 // pred_region
        %p236 = scmp.lt.s32.totalorder %s17, 1
        %s237 = scalar_select %p236, %s17, 1
        %p238 = scmp.lt.s32.totalorder %s20, 0
        %s239 = scalar_select %p238, %s20, 0
        %p240 = scmp.lt.s32.totalorder %s18, 1
        %s241 = scalar_select %p240, %s18, 1
        %s242 = smul.addr %s239, 2
        %s243 = sadd.s32 %s241, %s242
        %s244 = smul.addr %s237, 2
        %s245 = sadd.s32 %s243, %s244
        %s246 = smul.addr %s245, 4
        %s247 = scalar_lea.vmem %s2, %s246
      $region28: #{mhatt_forward.4} parent=15 // pred_fallthru
        _
      // Predicated region
      $region29: #{mhatt_forward.4} parent=15 // pred_check
        %p248 = pneg %p148
      $region30: #{mhatt_forward.4} parent=15 // pred_check_branch
        %250 = sbr.rel (%p248) target = $region32
      $region31: #{mhatt_forward.4} parent=15 // pred_region
        %p251 = scmp.lt.s32.totalorder %s17, 1
        %s252 = scalar_select %p251, %s17, 1
        %p253 = scmp.lt.s32.totalorder %s20, 0
        %s254 = scalar_select %p253, %s20, 0
        %s255 = sadd.s32 %s254, %s252
        %s256 = scalar_lea.vmem %s3, %s255
      $region32: #{mhatt_forward.4} parent=15 // pred_fallthru
        _
    $region16: #{mhatt_forward.4} parent=5 // pred_fallthru
      _
    %p257 = scmp.le.s32.totalorder 1, %s10
    %p258 = scmp.lt.s32.totalorder %s10, 5
    %p259 = pnand %p257, %p258
    %p260 = pneg %p259
    // Predicated region
    $region33: #{mhatt_forward.4} parent=5 // pred_check
      _
    $region34: #{mhatt_forward.4} parent=5 // pred_check_branch
      %262 = sbr.rel (%p259) target = $region36
    $region35: #{mhatt_forward.4} parent=5 // pred_region
      %s263 = ssub.s32 %s10, 1
      %p264 = scmp.lt.s32.totalorder %s21, 1
      %s265 = scalar_select %p264, %s21, 1
      %p266 = scmp.lt.s32.totalorder %s23, 0
      %s267 = scalar_select %p266, %s23, 0
      %p268 = scmp.lt.s32.totalorder %s22, 1
      %s269 = scalar_select %p268, %s22, 1
      %s270 = smul.addr %s267, 2
      %s271 = sadd.s32 %s269, %s270
      %s272 = smul.addr %s265, 2
      %s273 = sadd.s32 %s271, %s272
      %s274 = smul.addr %s273, 4
      %s275 = scalar_lea.vmem %s0, %s274
      %p276 = pneg %p66
      %p277 = pneg %p63
      %p278 = scmp.lt.s32.totalorder %s21, 1
      %s279 = scalar_select %p278, %s21, 1
      %p280 = scmp.lt.s32.totalorder %s24, 0
      %s281 = scalar_select %p280, %s24, 0
      %p282 = scmp.lt.s32.totalorder %s22, 1
      %s283 = scalar_select %p282, %s22, 1
      %s284 = smul.addr %s281, 2
      %s285 = sadd.s32 %s283, %s284
      %s286 = smul.addr %s279, 2
      %s287 = sadd.s32 %s285, %s286
      %s288 = smul.addr %s287, 4
      %s289 = scalar_lea.vmem %s1, %s288
      %p290 = pneg %p96
      %p291 = pneg %p93
      %p292 = scmp.lt.s32.totalorder %s21, 1
      %s293 = scalar_select %p292, %s21, 1
      %p294 = scmp.lt.s32.totalorder %s24, 0
      %s295 = scalar_select %p294, %s24, 0
      %p296 = scmp.lt.s32.totalorder %s22, 1
      %s297 = scalar_select %p296, %s22, 1
      %s298 = smul.addr %s295, 2
      %s299 = sadd.s32 %s297, %s298
      %s300 = smul.addr %s293, 2
      %s301 = sadd.s32 %s299, %s300
      %s302 = smul.addr %s301, 4
      %s303 = scalar_lea.vmem %s2, %s302
      %p304 = pneg %p126
      %p305 = pneg %p123
      %p306 = scmp.lt.s32.totalorder %s21, 1
      %s307 = scalar_select %p306, %s21, 1
      %p308 = scmp.lt.s32.totalorder %s24, 0
      %s309 = scalar_select %p308, %s24, 0
      %s310 = sadd.s32 %s309, %s307
      %s311 = scalar_lea.vmem %s3, %s310
      %p312 = pneg %p154
      %p313 = pneg %p151
      %p314 = pneg %p184
      %p315 = pneg %p181
      %p316 = scmp.lt.s32.totalorder %s21, 1
      %s317 = scalar_select %p316, %s21, 1
      %p318 = scmp.lt.s32.totalorder %s23, 0
      %s319 = scalar_select %p318, %s23, 0
      %p320 = scmp.lt.s32.totalorder %s22, 1
      %s321 = scalar_select %p320, %s22, 1
      %s322 = smul.addr %s319, 2
      %s323 = sadd.s32 %s321, %s322
      %s324 = smul.addr %s317, 2
      %s325 = sadd.s32 %s323, %s324
      %s326 = smul.addr %s325, 4
      %s327 = scalar_lea.vmem %s4, %s326
      %p328 = scmp.lt.s32.totalorder %s21, 1
      %s329 = scalar_select %p328, %s21, 1
      %p330 = scmp.lt.s32.totalorder %s23, 0
      %s331 = scalar_select %p330, %s23, 0
      %p332 = scmp.lt.s32.totalorder %s22, 1
      %s333 = scalar_select %p332, %s22, 1
      %s334 = smul.addr %s331, 2
      %s335 = sadd.s32 %s333, %s334
      %s336 = smul.addr %s329, 2
      %s337 = sadd.s32 %s335, %s336
      %s338 = smul.addr %s337, 4
      %s339 = scalar_lea.vmem %s0, %s338
      %p340 = scmp.lt.s32.totalorder %s21, 1
      %s341 = scalar_select %p340, %s21, 1
      %p342 = scmp.lt.s32.totalorder %s24, 0
      %s343 = scalar_select %p342, %s24, 0
      %p344 = scmp.lt.s32.totalorder %s22, 1
      %s345 = scalar_select %p344, %s22, 1
      %s346 = smul.addr %s343, 2
      %s347 = sadd.s32 %s345, %s346
      %s348 = smul.addr %s341, 2
      %s349 = sadd.s32 %s347, %s348
      %s350 = smul.addr %s349, 4
      %s351 = scalar_lea.vmem %s1, %s350
      %p352 = scmp.lt.s32.totalorder %s21, 1
      %s353 = scalar_select %p352, %s21, 1
      %p354 = scmp.lt.s32.totalorder %s24, 0
      %s355 = scalar_select %p354, %s24, 0
      %p356 = scmp.lt.s32.totalorder %s22, 1
      %s357 = scalar_select %p356, %s22, 1
      %s358 = smul.addr %s355, 2
      %s359 = sadd.s32 %s357, %s358
      %s360 = smul.addr %s353, 2
      %s361 = sadd.s32 %s359, %s360
      %s362 = smul.addr %s361, 4
      %s363 = scalar_lea.vmem %s2, %s362
      %p364 = scmp.lt.s32.totalorder %s21, 1
      %s365 = scalar_select %p364, %s21, 1
      %p366 = scmp.lt.s32.totalorder %s24, 0
      %s367 = scalar_select %p366, %s24, 0
      %s368 = sadd.s32 %s367, %s365
      %s369 = scalar_lea.vmem %s3, %s368
      %p370 = scmp.lt.s32.totalorder %s21, 1
      %s371 = scalar_select %p370, %s21, 1
      %p372 = scmp.lt.s32.totalorder %s23, 0
      %s373 = scalar_select %p372, %s23, 0
      %p374 = scmp.lt.s32.totalorder %s22, 1
      %s375 = scalar_select %p374, %s22, 1
      %s376 = smul.addr %s373, 2
      %s377 = sadd.s32 %s375, %s376
      %s378 = smul.addr %s371, 2
      %s379 = sadd.s32 %s377, %s378
      %s380 = smul.addr %s379, 4
      %s381 = scalar_lea.vmem %s4, %s380
      %p383 = scmp.eq.s32.totalorder %s24, 0
      // Predicated region
      $region37: #{mhatt_forward.4} parent=35 // pred_check
        %p384 = pneg %p383
      $region38: #{mhatt_forward.4} parent=35 // pred_check_branch
        %386 = sbr.rel (%p384) target = $region40
      $region39: #{mhatt_forward.4} parent=35 // pred_region
        %vm387 = vcmask 7168
        %388 = vst.msk [vmem:[#allocation2] sm:$0xff] %vm387, -inf
        %389 = vst.msk [vmem:[#allocation3] sm:$0xff] %vm387, 0.0
        %390 = vst [vmem:[#allocation4] sm:$0xff] 0.0
      $region40: #{mhatt_forward.4} parent=35 // pred_fallthru
        _
      %v391 = vld [vmem:[%s339] sm:$0xf]
      %v392 = vld [vmem:[%s351] sm:$0xf]
      %v393 = vld [vmem:[%s369] sm:$0x1]
      %v395 = vlaneseq
      %v396 = vshrl.u32 %v395, 7
      %v397 = vsub.s32 0, %v396
      %v398 = vrot.slane %v393, %v397
      %400 = vmatprep.subr.bf16.mxu0 0
      %401 = vmatpush1.bf16.xpose.msra.mxu0 %v392
      %402 = vmatprep.subr.bf16.mxu0 0
      %403 = vmatpush1.bf16.xpose.msra.mxu0 0
      %404 = vmatprep.subr.bf16.mxu0 0
      %405 = vmatpush1.bf16.xpose.msra.mxu0 0
      %406 = vmatprep.subr.bf16.mxu0 0
      %407 = vmatpush1.bf16.xpose.msra.mxu0 0
      %408 = vmatprep.subr.bf16.mxu0 0
      %409 = vmatpush1.bf16.xpose.msra.mxu0 0
      %410 = vmatprep.subr.bf16.mxu0 0
      %411 = vmatpush1.bf16.xpose.msra.mxu0 0
      %412 = vmatprep.subr.bf16.mxu0 0
      %413 = vmatpush1.bf16.xpose.msra.mxu0 0
      %414 = vmatprep.subr.bf16.mxu0 0
      %415 = vmatpush1.bf16.xpose.msra.mxu0 0
      %416 = vmatprep.subr.bf16.mxu0 0
      %417 = vmatpush1.bf16.xpose.msra.mxu0 0
      %418 = vmatprep.subr.bf16.mxu0 0
      %419 = vmatpush1.bf16.xpose.msra.mxu0 0
      %420 = vmatprep.subr.bf16.mxu0 0
      %421 = vmatpush1.bf16.xpose.msra.mxu0 0
      %422 = vmatprep.subr.bf16.mxu0 0
      %423 = vmatpush1.bf16.xpose.msra.mxu0 0
      %424 = vmatprep.subr.bf16.mxu0 0
      %425 = vmatpush1.bf16.xpose.msra.mxu0 0
      %426 = vmatprep.subr.bf16.mxu0 0
      %427 = vmatpush1.bf16.xpose.msra.mxu0 0
      %428 = vmatprep.subr.bf16.mxu0 0
      %429 = vmatpush1.bf16.xpose.msra.mxu0 0
      %430 = vmatprep.subr.bf16.mxu0 0
      %431 = vmatpush1.bf16.xpose.msra.mxu0 0
      %432 = vmatprep.mubr.bf16.mxu0 0
      %433 = vmatmul.mubr.bf16.gmra.mrb[0].mxu0 %v391
      %v434 = vpop.f32.mrb[0].mxu0
      %v435 = vadd.f32 %v398, %v434
      %v436 = vpop.f32.mrb[0].mxu0
      %v437 = vpop.f32.mrb[0].mxu0
      %v438 = vpop.f32.mrb[0].mxu0
      %439 = vdwg.mxu0
      %v440 = vld [vmem:[#allocation2] sm:$0xff]
      %vm441 = vcmask 64512
      %v442 = vsel %vm441, %v435, -inf
      %443 = vmax.xlane.f32.xlu0 %v442
      %v444 = vpop.xlane.xlu0 %443
      %v445 = vmax.f32 %v440, %v444
      %v446 = vsub.f32 %v440, %v445
      %v447 = vmul.f32 %v446, 1.442695
      %v448 = vpow.pop %v447
      %450 = vset.pattern.permute.xlu0 0
      %451 = vperm.xlu0 %450, %v445
      %v452 = vpop.permute.xlu0 %451
      %v454 = vsub.f32 %v435, %v452
      %v455 = vmul.f32 %v454, 1.442695
      %v456 = vpow.pop %v455
      %v457 = vld [vmem:[#allocation3] sm:$0xff]
      %v458 = vmul.f32 %v448, %v457
      %v459 = vsel %vm441, %v456, 0.0
      %460 = vadd.xlane.f32.xlu0 %v459
      %v461 = vpop.xlane.xlu0 %460
      %v462 = vadd.f32 %v458, %v461
      %vm463 = vcmask 7168
      %464 = vst.msk [vmem:[#allocation3] sm:$0xff] %vm463, %v462
      %v465 = vld [vmem:[#allocation4] sm:$0xff]
      %467 = vset.pattern.permute.xlu0 0
      %468 = vperm.xlu0 %467, %v448
      %v469 = vpop.permute.xlu0 %468
      %v471 = vmul.f32 %v469, %v465
      %v472 = vpack.c.bf16 %v456, %v456
      %v473 = vld [vmem:[%s363] sm:$0xf]
      %v475 = vsel %vm441, %v472, 0
      %vm477 = vcmask 1043456
      %v479 = vsel %vm477, %v473, 0
      %481 = vmatprep.subr.bf16.mxu0 0
      %482 = vmatpush1.bf16.msra.mxu0 %v479
      %483 = vmatprep.subr.bf16.mxu0 0
      %484 = vmatpush1.bf16.msra.mxu0 0
      %485 = vmatprep.subr.bf16.mxu0 0
      %486 = vmatpush1.bf16.msra.mxu0 0
      %487 = vmatprep.subr.bf16.mxu0 0
      %488 = vmatpush1.bf16.msra.mxu0 0
      %489 = vmatprep.subr.bf16.mxu0 0
      %490 = vmatpush1.bf16.msra.mxu0 0
      %491 = vmatprep.subr.bf16.mxu0 0
      %492 = vmatpush1.bf16.msra.mxu0 0
      %493 = vmatprep.subr.bf16.mxu0 0
      %494 = vmatpush1.bf16.msra.mxu0 0
      %495 = vmatprep.subr.bf16.mxu0 0
      %496 = vmatpush1.bf16.msra.mxu0 0
      %497 = vmatprep.subr.bf16.mxu0 0
      %498 = vmatpush1.bf16.msra.mxu0 0
      %499 = vmatprep.subr.bf16.mxu0 0
      %500 = vmatpush1.bf16.msra.mxu0 0
      %501 = vmatprep.subr.bf16.mxu0 0
      %502 = vmatpush1.bf16.msra.mxu0 0
      %503 = vmatprep.subr.bf16.mxu0 0
      %504 = vmatpush1.bf16.msra.mxu0 0
      %505 = vmatprep.subr.bf16.mxu0 0
      %506 = vmatpush1.bf16.msra.mxu0 0
      %507 = vmatprep.subr.bf16.mxu0 0
      %508 = vmatpush1.bf16.msra.mxu0 0
      %509 = vmatprep.subr.bf16.mxu0 0
      %510 = vmatpush1.bf16.msra.mxu0 0
      %511 = vmatprep.subr.bf16.mxu0 0
      %512 = vmatpush1.bf16.msra.mxu0 0
      %513 = vmatprep.mubr.bf16.mxu0 0
      %514 = vmatmul.mubr.bf16.gmra.mrb[0].mxu0 %v475
      %v515 = vpop.f32.mrb[0].mxu0
      %v516 = vadd.f32 0.0, %v515
      %v517 = vpop.f32.mrb[0].mxu0
      %v518 = vpop.f32.mrb[0].mxu0
      %v519 = vpop.f32.mrb[0].mxu0
      %520 = vdwg.mxu0
      %v521 = vadd.f32 %v471, %v516
      %522 = vst [vmem:[#allocation4] sm:$0xff] %v521
      %523 = vst.msk [vmem:[#allocation2] sm:$0xff] %vm463, %v445
      // Predicated region
      $region41: #{mhatt_forward.4} parent=35 // pred_check
        %p524 = pneg %p383
      $region42: #{mhatt_forward.4} parent=35 // pred_check_branch
        %526 = sbr.rel (%p524) target = $region44
      $region43: #{mhatt_forward.4} parent=35 // pred_region
        %v527 = vld [vmem:[#allocation4] sm:$0xff]
        %v528 = vld [vmem:[#allocation3] sm:$0xff]
        %v529 = vrcp.pop %v528
        %531 = vset.pattern.permute.xlu0 0
        %532 = vperm.xlu0 %531, %v529
        %v533 = vpop.permute.xlu0 %532
        %v535 = vmul.f32 %v527, %v533
        %v536 = vpack.c.bf16 %v535, %v535
        %537 = vst [vmem:[%s381] sm:$0xf] %v536
      $region44: #{mhatt_forward.4} parent=35 // pred_fallthru
        _
      %p538 = scmp.lt.s32.totalorder %s21, 1
      %s539 = scalar_select %p538, %s21, 1
      %p540 = scmp.lt.s32.totalorder %s23, 0
      %s541 = scalar_select %p540, %s23, 0
      %p542 = scmp.lt.s32.totalorder %s22, 1
      %s543 = scalar_select %p542, %s22, 1
      %s544 = smul.addr %s541, 2
      %s545 = sadd.s32 %s543, %s544
      %s546 = smul.addr %s539, 2
      %s547 = sadd.s32 %s545, %s546
      %s548 = smul.addr %s547, 4
      %s549 = scalar_lea.vmem %s4, %s548
      // Predicated region
      $region45: #{mhatt_forward.4} parent=35 // pred_check
        %p550 = pneg %p181
      $region46: #{mhatt_forward.4} parent=35 // pred_check_branch
        %552 = sbr.rel (%p550) target = $region48
      $region47: #{mhatt_forward.4} parent=35 // pred_region
        _
      $region48: #{mhatt_forward.4} parent=35 // pred_fallthru
        _
    $region36: #{mhatt_forward.4} parent=5 // pred_fallthru
      _
    %p553 = scmp.le.s32.totalorder 2, %s10
    // Predicated region
    $region49: #{mhatt_forward.4} parent=5 // pred_check
      %p554 = pneg %p553
    $region50: #{mhatt_forward.4} parent=5 // pred_check_branch
      %556 = sbr.rel (%p554) target = $region52
    $region51: #{mhatt_forward.4} parent=5 // pred_region
      %s557 = ssub.s32 %s10, 2
      // Predicated region
      $region53: #{mhatt_forward.4} parent=51 // pred_check
        %p558 = pneg %p187
      $region54: #{mhatt_forward.4} parent=51 // pred_check_branch
        %560 = sbr.rel (%p558) target = $region56
      $region55: #{mhatt_forward.4} parent=51 // pred_region
        %p561 = scmp.lt.s32.totalorder %s25, 1
        %s562 = scalar_select %p561, %s25, 1
        %p563 = scmp.lt.s32.totalorder %s27, 0
        %s564 = scalar_select %p563, %s27, 0
        %p565 = scmp.lt.s32.totalorder %s26, 1
        %s566 = scalar_select %p565, %s26, 1
        %s567 = smul.addr %s564, 2
        %s568 = sadd.s32 %s566, %s567
        %s569 = smul.addr %s562, 2
        %s570 = sadd.s32 %s568, %s569
        %s571 = smul.addr %s570, 4
        %s572 = scalar_lea.vmem %s4, %s571
      $region56: #{mhatt_forward.4} parent=51 // pred_fallthru
        _
    $region52: #{mhatt_forward.4} parent=5 // pred_fallthru
      _
  $region6: #{mhatt_forward.4} parent=0 // loop_footer
    %s14 = sadd.s32 1, %s10
  $region7: #{mhatt_forward.4} parent=0 // loop_footer_branch
    %9 = sbr.rel target = $region3
  $region8: #{mhatt_forward.4} parent=0 // loop_exit
    _

// kernel: mhatt_forward.5
$region0: #{mhatt_forward.5}
  #allocation0 [shape = 'u32[]', space=smem, size = 0x4, offset = 0x4, fixed_abs, tag = 'smem constant byte address 0x4 - core index']
  #allocation1 [shape = 'u32[144,128]{1,0:T(1,128)}', space=vmem, size = 0x12000, scoped, tag = 'internal scratch']
  %s0 = inlined_call_operand.vmem [shape: bf16[16,256], index: 0, kind: input, shape index: {}]
  %s1 = inlined_call_operand.vmem [shape: bf16[256,256], index: 1, kind: input, shape index: {}]
  %s2 = inlined_call_operand.vmem [shape: f32[1,256], index: 2, kind: input, shape index: {}]
  %s3 = inlined_call_operand.hbm [shape: f32[16,256], index: 3, kind: output, shape index: {}]
  %s4 = sld [smem:[#allocation0]]
  $region22: #{mhatt_forward.5} parent=0
    _
  %s6 = ssub.s32 1, %s4
  %s7 = scalar_select 0, %s6, %s4
  $region1: #{mhatt_forward.5} parent=0
    #allocation2 [shape = 'u8[16384]{0}', space=vmem, size = 0x4000, scoped, tag = 'output window, operand 0, single buffered']
    #allocation3 [shape = 's32[1]{0}', space=sflag, size = 0x4, scoped, tag = 'scoped memory for mhatt_forward.5']
    %8 = vsyncpa [#allocation3], 0
    // Predicated region
    $region2: #{mhatt_forward.5} parent=1 // pred_check
      _
    $region3: #{mhatt_forward.5} parent=1 // pred_check_branch
      %10 = sbr.rel (0) target = $region5
    $region4: #{mhatt_forward.5} parent=1 // pred_region
      _
    $region5: #{mhatt_forward.5} parent=1 // pred_fallthru
      _
    // Predicated region
    $region6: #{mhatt_forward.5} parent=1 // pred_check
      _
    $region7: #{mhatt_forward.5} parent=1 // pred_check_branch
      %12 = sbr.rel (0) target = $region9
    $region8: #{mhatt_forward.5} parent=1 // pred_region
      _
    $region9: #{mhatt_forward.5} parent=1 // pred_fallthru
      _
    // Predicated region
    $region10: #{mhatt_forward.5} parent=1 // pred_check
      _
    $region11: #{mhatt_forward.5} parent=1 // pred_check_branch
      %14 = sbr.rel (0) target = $region13
    $region12: #{mhatt_forward.5} parent=1 // pred_region
      _
    $region13: #{mhatt_forward.5} parent=1 // pred_fallthru
      _
    %v15 = vld [vmem:[%s0] sm:$0xff]
    %v16 = vld [vmem:[%s0 + $0x8] sm:$0xff]
    %v17 = vld [vmem:[%s1] sm:$0xff]
    %v18 = vld [vmem:[%s1 + $0x8] sm:$0xff]
    %v19 = vld [vmem:[%s1 + $0x10] sm:$0xff]
    %v20 = vld [vmem:[%s1 + $0x18] sm:$0xff]
    %v21 = vld [vmem:[%s1 + $0x20] sm:$0xff]
    %v22 = vld [vmem:[%s1 + $0x28] sm:$0xff]
    %v23 = vld [vmem:[%s1 + $0x30] sm:$0xff]
    %v24 = vld [vmem:[%s1 + $0x38] sm:$0xff]
    %v25 = vld [vmem:[%s1 + $0x40] sm:$0xff]
    %v26 = vld [vmem:[%s1 + $0x48] sm:$0xff]
    %v27 = vld [vmem:[%s1 + $0x50] sm:$0xff]
    %v28 = vld [vmem:[%s1 + $0x58] sm:$0xff]
    %v29 = vld [vmem:[%s1 + $0x60] sm:$0xff]
    %v30 = vld [vmem:[%s1 + $0x68] sm:$0xff]
    %v31 = vld [vmem:[%s1 + $0x70] sm:$0xff]
    %v32 = vld [vmem:[%s1 + $0x78] sm:$0xff]
    %v33 = vld [vmem:[%s1 + $0x80] sm:$0xff]
    %v34 = vld [vmem:[%s1 + $0x88] sm:$0xff]
    %v35 = vld [vmem:[%s1 + $0x90] sm:$0xff]
    %v36 = vld [vmem:[%s1 + $0x98] sm:$0xff]
    %v37 = vld [vmem:[%s1 + $0xa0] sm:$0xff]
    %v38 = vld [vmem:[%s1 + $0xa8] sm:$0xff]
    %v39 = vld [vmem:[%s1 + $0xb0] sm:$0xff]
    %v40 = vld [vmem:[%s1 + $0xb8] sm:$0xff]
    %v41 = vld [vmem:[%s1 + $0xc0] sm:$0xff]
    %v42 = vld [vmem:[%s1 + $0xc8] sm:$0xff]
    %v43 = vld [vmem:[%s1 + $0xd0] sm:$0xff]
    %v44 = vld [vmem:[%s1 + $0xd8] sm:$0xff]
    %v45 = vld [vmem:[%s1 + $0xe0] sm:$0xff]
    %v46 = vld [vmem:[%s1 + $0xe8] sm:$0xff]
    %v47 = vld [vmem:[%s1 + $0xf0] sm:$0xff]
    %v48 = vld [vmem:[%s1 + $0xf8] sm:$0xff]
    %v49 = vld [vmem:[%s2] sm:$0x3]
    %v51 = vlaneseq
    %v52 = vshrl.u32 %v51, 7
    %v53 = vsub.s32 0, %v52
    %v54 = vrot.slane %v49, %v53
    %v55 = vlaneseq
    %v56 = vshrl.u32 %v55, 7
    %v57 = vsub.s32 1, %v56
    %v58 = vrot.slane %v49, %v57
    %v63 = vunpack.c.l.b16 %v15
    %v64 = vunpack.c.h.b16 %v15
    %v65 = vunpack.c.l.b16 %v16
    %v66 = vunpack.c.h.b16 %v16
    %v67 = vpack.c.b16 %v65, %v63
    %v68 = vpack.c.b16 %v66, %v64
    %v103 = vunpack.c.l.b16 %v17
    %v104 = vunpack.c.h.b16 %v17
    %v105 = vunpack.c.l.b16 %v18
    %v106 = vunpack.c.h.b16 %v18
    %v107 = vunpack.c.l.b16 %v19
    %v108 = vunpack.c.h.b16 %v19
    %v109 = vunpack.c.l.b16 %v20
    %v110 = vunpack.c.h.b16 %v20
    %v111 = vunpack.c.l.b16 %v21
    %v112 = vunpack.c.h.b16 %v21
    %v113 = vunpack.c.l.b16 %v22
    %v114 = vunpack.c.h.b16 %v22
    %v115 = vunpack.c.l.b16 %v23
    %v116 = vunpack.c.h.b16 %v23
    %v117 = vunpack.c.l.b16 %v24
    %v118 = vunpack.c.h.b16 %v24
    %v119 = vunpack.c.l.b16 %v25
    %v120 = vunpack.c.h.b16 %v25
    %v121 = vunpack.c.l.b16 %v26
    %v122 = vunpack.c.h.b16 %v26
    %v123 = vunpack.c.l.b16 %v27
    %v124 = vunpack.c.h.b16 %v27
    %v125 = vunpack.c.l.b16 %v28
    %v126 = vunpack.c.h.b16 %v28
    %v127 = vunpack.c.l.b16 %v29
    %v128 = vunpack.c.h.b16 %v29
    %v129 = vunpack.c.l.b16 %v30
    %v130 = vunpack.c.h.b16 %v30
    %v131 = vunpack.c.l.b16 %v31
    %v132 = vunpack.c.h.b16 %v31
    %v133 = vunpack.c.l.b16 %v32
    %v134 = vunpack.c.h.b16 %v32
    %v135 = vunpack.c.l.b16 %v33
    %v136 = vunpack.c.h.b16 %v33
    %v137 = vunpack.c.l.b16 %v34
    %v138 = vunpack.c.h.b16 %v34
    %v139 = vunpack.c.l.b16 %v35
    %v140 = vunpack.c.h.b16 %v35
    %v141 = vunpack.c.l.b16 %v36
    %v142 = vunpack.c.h.b16 %v36
    %v143 = vunpack.c.l.b16 %v37
    %v144 = vunpack.c.h.b16 %v37
    %v145 = vunpack.c.l.b16 %v38
    %v146 = vunpack.c.h.b16 %v38
    %v147 = vunpack.c.l.b16 %v39
    %v148 = vunpack.c.h.b16 %v39
    %v149 = vunpack.c.l.b16 %v40
    %v150 = vunpack.c.h.b16 %v40
    %v151 = vunpack.c.l.b16 %v41
    %v152 = vunpack.c.h.b16 %v41
    %v153 = vunpack.c.l.b16 %v42
    %v154 = vunpack.c.h.b16 %v42
    %v155 = vunpack.c.l.b16 %v43
    %v156 = vunpack.c.h.b16 %v43
    %v157 = vunpack.c.l.b16 %v44
    %v158 = vunpack.c.h.b16 %v44
    %v159 = vunpack.c.l.b16 %v45
    %v160 = vunpack.c.h.b16 %v45
    %v161 = vunpack.c.l.b16 %v46
    %v162 = vunpack.c.h.b16 %v46
    %v163 = vunpack.c.l.b16 %v47
    %v164 = vunpack.c.h.b16 %v47
    %v165 = vunpack.c.l.b16 %v48
    %v166 = vunpack.c.h.b16 %v48
    %v167 = vpack.c.b16 %v105, %v103
    %v168 = vpack.c.b16 %v106, %v104
    %v169 = vpack.c.b16 %v109, %v107
    %v170 = vpack.c.b16 %v110, %v108
    %v171 = vpack.c.b16 %v113, %v111
    %v172 = vpack.c.b16 %v114, %v112
    %v173 = vpack.c.b16 %v117, %v115
    %v174 = vpack.c.b16 %v118, %v116
    %v175 = vpack.c.b16 %v121, %v119
    %v176 = vpack.c.b16 %v122, %v120
    %v177 = vpack.c.b16 %v125, %v123
    %v178 = vpack.c.b16 %v126, %v124
    %v179 = vpack.c.b16 %v129, %v127
    %v180 = vpack.c.b16 %v130, %v128
    %v181 = vpack.c.b16 %v133, %v131
    %v182 = vpack.c.b16 %v134, %v132
    %v183 = vpack.c.b16 %v137, %v135
    %v184 = vpack.c.b16 %v138, %v136
    %v185 = vpack.c.b16 %v141, %v139
    %v186 = vpack.c.b16 %v142, %v140
    %v187 = vpack.c.b16 %v145, %v143
    %v188 = vpack.c.b16 %v146, %v144
    %v189 = vpack.c.b16 %v149, %v147
    %v190 = vpack.c.b16 %v150, %v148
    %v191 = vpack.c.b16 %v153, %v151
    %v192 = vpack.c.b16 %v154, %v152
    %v193 = vpack.c.b16 %v157, %v155
    %v194 = vpack.c.b16 %v158, %v156
    %v195 = vpack.c.b16 %v161, %v159
    %v196 = vpack.c.b16 %v162, %v160
    %v197 = vpack.c.b16 %v165, %v163
    %v198 = vpack.c.b16 %v166, %v164
    %231 = vmatprep.subr.bf16.mxu0 %v168
    %232 = vmatpush1.bf16.msra.mxu0 %v167
    %233 = vmatprep.subr.bf16.mxu0 %v170
    %234 = vmatpush1.bf16.msra.mxu0 %v169
    %235 = vmatprep.subr.bf16.mxu0 %v172
    %236 = vmatpush1.bf16.msra.mxu0 %v171
    %237 = vmatprep.subr.bf16.mxu0 %v174
    %238 = vmatpush1.bf16.msra.mxu0 %v173
    %239 = vmatprep.subr.bf16.mxu0 %v176
    %240 = vmatpush1.bf16.msra.mxu0 %v175
    %241 = vmatprep.subr.bf16.mxu0 %v178
    %242 = vmatpush1.bf16.msra.mxu0 %v177
    %243 = vmatprep.subr.bf16.mxu0 %v180
    %244 = vmatpush1.bf16.msra.mxu0 %v179
    %245 = vmatprep.subr.bf16.mxu0 %v182
    %246 = vmatpush1.bf16.msra.mxu0 %v181
    %247 = vmatprep.subr.bf16.mxu0 %v184
    %248 = vmatpush1.bf16.msra.mxu0 %v183
    %249 = vmatprep.subr.bf16.mxu0 %v186
    %250 = vmatpush1.bf16.msra.mxu0 %v185
    %251 = vmatprep.subr.bf16.mxu0 %v188
    %252 = vmatpush1.bf16.msra.mxu0 %v187
    %253 = vmatprep.subr.bf16.mxu0 %v190
    %254 = vmatpush1.bf16.msra.mxu0 %v189
    %255 = vmatprep.subr.bf16.mxu0 %v192
    %256 = vmatpush1.bf16.msra.mxu0 %v191
    %257 = vmatprep.subr.bf16.mxu0 %v194
    %258 = vmatpush1.bf16.msra.mxu0 %v193
    %259 = vmatprep.subr.bf16.mxu0 %v196
    %260 = vmatpush1.bf16.msra.mxu0 %v195
    %261 = vmatprep.subr.bf16.mxu0 %v198
    %262 = vmatpush1.bf16.msra.mxu0 %v197
    %263 = vmatprep.mubr.bf16.mxu0 %v68
    %264 = vmatmul.mubr.bf16.gmra.mrb[0].mxu0 %v67
    %v265 = vpop.f32.mrb[0].mxu0
    %v266 = vadd.f32 %v54, %v265
    %v267 = vpop.f32.mrb[0].mxu0
    %v268 = vadd.f32 %v58, %v267
    %v269 = vpop.f32.mrb[0].mxu0
    %v270 = vadd.f32 %v54, %v269
    %v271 = vpop.f32.mrb[0].mxu0
    %v272 = vadd.f32 %v58, %v271
    %273 = vdwg.mxu0
    %274 = vst [vmem:[#allocation2] sm:$0xff] %v266
    %275 = vst [vmem:[#allocation2 + $0x8] sm:$0xff] %v268
    %276 = vst [vmem:[#allocation2 + $0x10] sm:$0xff] %v270
    %277 = vst [vmem:[#allocation2 + $0x18] sm:$0xff] %v272
    // Predicated region
    $region14: #{mhatt_forward.5} parent=1 // pred_check
      _
    $region15: #{mhatt_forward.5} parent=1 // pred_check_branch
      %279 = sbr.rel (0) target = $region17
    $region16: #{mhatt_forward.5} parent=1 // pred_region
      %s281 = ssub.s32 512, 512
      %282 = vsyncadd [#allocation3], %s281
      %s283 = sshll.u32 [#allocation2], 4
      %s284 = int_to_ptr.vmem [resolvable:$true] %s283
      %289 = dma.vmem_to_hbm [thread:$0]  %s284, 512, %s3, [#allocation3], 256, 256, 16
    $region17: #{mhatt_forward.5} parent=1 // pred_fallthru
      _
    // Predicated region
    $region18: #{mhatt_forward.5} parent=1 // pred_check
      _
    $region19: #{mhatt_forward.5} parent=1 // pred_check_branch
      %291 = sbr.rel (0) target = $region21
    $region20: #{mhatt_forward.5} parent=1 // pred_region
      %292 = dma.done [#allocation3], 512
    $region21: #{mhatt_forward.5} parent=1 // pred_fallthru
      _
    %293 = vsyncpa [#allocation3], 1

// kernel: mhatt_forward.3
$region0: #{mhatt_forward.3}
  #allocation0 [shape = 'u32[]', space=smem, size = 0x4, offset = 0x4, fixed_abs, tag = 'smem constant byte address 0x4 - core index']
  #allocation1 [shape = 'u32[144,128]{1,0:T(1,128)}', space=vmem, size = 0x12000, scoped, tag = 'internal scratch']
  %s0 = inlined_call_operand.vmem [shape: bf16[16,512], index: 0, kind: input, shape index: {}]
  %s1 = inlined_call_operand.vmem [shape: bf16[16,512], index: 1, kind: input, shape index: {}]
  %s2 = inlined_call_operand.vmem [shape: bf16[16,512], index: 2, kind: input, shape index: {}]
  %s3 = inlined_call_operand.vmem [shape: bf16[512,256], index: 3, kind: input, shape index: {}]
  %s4 = inlined_call_operand.vmem [shape: bf16[512,256], index: 4, kind: input, shape index: {}]
  %s5 = inlined_call_operand.vmem [shape: bf16[512,256], index: 5, kind: input, shape index: {}]
  %s6 = inlined_call_operand.vmem [shape: f32[1,256], index: 6, kind: input, shape index: {}]
  %s7 = inlined_call_operand.vmem [shape: f32[1,256], index: 7, kind: input, shape index: {}]
  %s8 = inlined_call_operand.vmem [shape: f32[1,256], index: 8, kind: input, shape index: {}]
  %s9 = inlined_call_operand.vmem [shape: bf16[16,256], index: 9, kind: output, shape index: {0}]
  %s10 = inlined_call_operand.vmem [shape: bf16[16,256], index: 10, kind: output, shape index: {1}]
  %s11 = inlined_call_operand.vmem [shape: bf16[16,256], index: 11, kind: output, shape index: {2}]
  %12 = xla_tuple %s9, %s10, %s11
  %s13 = sld [smem:[#allocation0]]
  $region62: #{mhatt_forward.3} parent=0
    _
  %s15 = ssub.s32 1, %s13
  %s16 = scalar_select 0, %s15, %s13
  // Predicated region
  $region2: #{mhatt_forward.3} parent=0 // pred_check
    _
  $region3: #{mhatt_forward.3} parent=0 // pred_check_branch
    %18 = sbr.rel (0) target = $region5
  $region4: #{mhatt_forward.3} parent=0 // pred_region
    _
  $region5: #{mhatt_forward.3} parent=0 // pred_fallthru
    _
  // Predicated region
  $region6: #{mhatt_forward.3} parent=0 // pred_check
    _
  $region7: #{mhatt_forward.3} parent=0 // pred_check_branch
    %20 = sbr.rel (0) target = $region9
  $region8: #{mhatt_forward.3} parent=0 // pred_region
    _
  $region9: #{mhatt_forward.3} parent=0 // pred_fallthru
    _
  // Predicated region
  $region10: #{mhatt_forward.3} parent=0 // pred_check
    _
  $region11: #{mhatt_forward.3} parent=0 // pred_check_branch
    %22 = sbr.rel (0) target = $region13
  $region12: #{mhatt_forward.3} parent=0 // pred_region
    _
  $region13: #{mhatt_forward.3} parent=0 // pred_fallthru
    _
  // Predicated region
  $region14: #{mhatt_forward.3} parent=0 // pred_check
    _
  $region15: #{mhatt_forward.3} parent=0 // pred_check_branch
    %24 = sbr.rel (0) target = $region17
  $region16: #{mhatt_forward.3} parent=0 // pred_region
    _
  $region17: #{mhatt_forward.3} parent=0 // pred_fallthru
    _
  // Predicated region
  $region18: #{mhatt_forward.3} parent=0 // pred_check
    _
  $region19: #{mhatt_forward.3} parent=0 // pred_check_branch
    %26 = sbr.rel (0) target = $region21
  $region20: #{mhatt_forward.3} parent=0 // pred_region
    _
  $region21: #{mhatt_forward.3} parent=0 // pred_fallthru
    _
  // Predicated region
  $region22: #{mhatt_forward.3} parent=0 // pred_check
    _
  $region23: #{mhatt_forward.3} parent=0 // pred_check_branch
    %28 = sbr.rel (0) target = $region25
  $region24: #{mhatt_forward.3} parent=0 // pred_region
    _
  $region25: #{mhatt_forward.3} parent=0 // pred_fallthru
    _
  // Predicated region
  $region26: #{mhatt_forward.3} parent=0 // pred_check
    _
  $region27: #{mhatt_forward.3} parent=0 // pred_check_branch
    %30 = sbr.rel (0) target = $region29
  $region28: #{mhatt_forward.3} parent=0 // pred_region
    _
  $region29: #{mhatt_forward.3} parent=0 // pred_fallthru
    _
  // Predicated region
  $region30: #{mhatt_forward.3} parent=0 // pred_check
    _
  $region31: #{mhatt_forward.3} parent=0 // pred_check_branch
    %32 = sbr.rel (0) target = $region33
  $region32: #{mhatt_forward.3} parent=0 // pred_region
    _
  $region33: #{mhatt_forward.3} parent=0 // pred_fallthru
    _
  // Predicated region
  $region34: #{mhatt_forward.3} parent=0 // pred_check
    _
  $region35: #{mhatt_forward.3} parent=0 // pred_check_branch
    %34 = sbr.rel (0) target = $region37
  $region36: #{mhatt_forward.3} parent=0 // pred_region
    _
  $region37: #{mhatt_forward.3} parent=0 // pred_fallthru
    _
  %v35 = vld [vmem:[%s0] sm:$0xff]
  %v36 = vld [vmem:[%s0 + $0x8] sm:$0xff]
  %v37 = vld [vmem:[%s0 + $0x10] sm:$0xff]
  %v38 = vld [vmem:[%s0 + $0x18] sm:$0xff]
  %v39 = vld [vmem:[%s3] sm:$0xff]
  %v40 = vld [vmem:[%s3 + $0x8] sm:$0xff]
  %v41 = vld [vmem:[%s3 + $0x10] sm:$0xff]
  %v42 = vld [vmem:[%s3 + $0x18] sm:$0xff]
  %v43 = vld [vmem:[%s3 + $0x20] sm:$0xff]
  %v44 = vld [vmem:[%s3 + $0x28] sm:$0xff]
  %v45 = vld [vmem:[%s3 + $0x30] sm:$0xff]
  %v46 = vld [vmem:[%s3 + $0x38] sm:$0xff]
  %v47 = vld [vmem:[%s3 + $0x40] sm:$0xff]
  %v48 = vld [vmem:[%s3 + $0x48] sm:$0xff]
  %v49 = vld [vmem:[%s3 + $0x50] sm:$0xff]
  %v50 = vld [vmem:[%s3 + $0x58] sm:$0xff]
  %v51 = vld [vmem:[%s3 + $0x60] sm:$0xff]
  %v52 = vld [vmem:[%s3 + $0x68] sm:$0xff]
  %v53 = vld [vmem:[%s3 + $0x70] sm:$0xff]
  %v54 = vld [vmem:[%s3 + $0x78] sm:$0xff]
  %v55 = vld [vmem:[%s3 + $0x80] sm:$0xff]
  %v56 = vld [vmem:[%s3 + $0x88] sm:$0xff]
  %v57 = vld [vmem:[%s3 + $0x90] sm:$0xff]
  %v58 = vld [vmem:[%s3 + $0x98] sm:$0xff]
  %v59 = vld [vmem:[%s3 + $0xa0] sm:$0xff]
  %v60 = vld [vmem:[%s3 + $0xa8] sm:$0xff]
  %v61 = vld [vmem:[%s3 + $0xb0] sm:$0xff]
  %v62 = vld [vmem:[%s3 + $0xb8] sm:$0xff]
  %v63 = vld [vmem:[%s3 + $0xc0] sm:$0xff]
  %v64 = vld [vmem:[%s3 + $0xc8] sm:$0xff]
  %v65 = vld [vmem:[%s3 + $0xd0] sm:$0xff]
  %v66 = vld [vmem:[%s3 + $0xd8] sm:$0xff]
  %v67 = vld [vmem:[%s3 + $0xe0] sm:$0xff]
  %v68 = vld [vmem:[%s3 + $0xe8] sm:$0xff]
  %v69 = vld [vmem:[%s3 + $0xf0] sm:$0xff]
  %v70 = vld [vmem:[%s3 + $0xf8] sm:$0xff]
  %v71 = vld [vmem:[%s3 + $0x100] sm:$0xff]
  %v72 = vld [vmem:[%s3 + $0x108] sm:$0xff]
  %v73 = vld [vmem:[%s3 + $0x110] sm:$0xff]
  %v74 = vld [vmem:[%s3 + $0x118] sm:$0xff]
  %v75 = vld [vmem:[%s3 + $0x120] sm:$0xff]
  %v76 = vld [vmem:[%s3 + $0x128] sm:$0xff]
  %v77 = vld [vmem:[%s3 + $0x130] sm:$0xff]
  %v78 = vld [vmem:[%s3 + $0x138] sm:$0xff]
  %v79 = vld [vmem:[%s3 + $0x140] sm:$0xff]
  %v80 = vld [vmem:[%s3 + $0x148] sm:$0xff]
  %v81 = vld [vmem:[%s3 + $0x150] sm:$0xff]
  %v82 = vld [vmem:[%s3 + $0x158] sm:$0xff]
  %v83 = vld [vmem:[%s3 + $0x160] sm:$0xff]
  %v84 = vld [vmem:[%s3 + $0x168] sm:$0xff]
  %v85 = vld [vmem:[%s3 + $0x170] sm:$0xff]
  %v86 = vld [vmem:[%s3 + $0x178] sm:$0xff]
  %v87 = vld [vmem:[%s3 + $0x180] sm:$0xff]
  %v88 = vld [vmem:[%s3 + $0x188] sm:$0xff]
  %v89 = vld [vmem:[%s3 + $0x190] sm:$0xff]
  %v90 = vld [vmem:[%s3 + $0x198] sm:$0xff]
  %v91 = vld [vmem:[%s3 + $0x1a0] sm:$0xff]
  %v92 = vld [vmem:[%s3 + $0x1a8] sm:$0xff]
  %v93 = vld [vmem:[%s3 + $0x1b0] sm:$0xff]
  %v94 = vld [vmem:[%s3 + $0x1b8] sm:$0xff]
  %v95 = vld [vmem:[%s3 + $0x1c0] sm:$0xff]
  %v96 = vld [vmem:[%s3 + $0x1c8] sm:$0xff]
  %v97 = vld [vmem:[%s3 + $0x1d0] sm:$0xff]
  %v98 = vld [vmem:[%s3 + $0x1d8] sm:$0xff]
  %v99 = vld [vmem:[%s3 + $0x1e0] sm:$0xff]
  %v100 = vld [vmem:[%s3 + $0x1e8] sm:$0xff]
  %v101 = vld [vmem:[%s3 + $0x1f0] sm:$0xff]
  %v102 = vld [vmem:[%s3 + $0x1f8] sm:$0xff]
  %v103 = vld [vmem:[%s6] sm:$0x3]
  %v105 = vlaneseq
  %v106 = vshrl.u32 %v105, 7
  %v107 = vsub.s32 0, %v106
  %v108 = vrot.slane %v103, %v107
  %v109 = vlaneseq
  %v110 = vshrl.u32 %v109, 7
  %v111 = vsub.s32 1, %v110
  %v112 = vrot.slane %v103, %v111
  %v119 = vunpack.c.l.b16 %v35
  %v120 = vunpack.c.h.b16 %v35
  %v121 = vunpack.c.l.b16 %v36
  %v122 = vunpack.c.h.b16 %v36
  %v123 = vunpack.c.l.b16 %v37
  %v124 = vunpack.c.h.b16 %v37
  %v125 = vunpack.c.l.b16 %v38
  %v126 = vunpack.c.h.b16 %v38
  %v127 = vpack.c.b16 %v123, %v119
  %v128 = vpack.c.b16 %v124, %v120
  %v129 = vpack.c.b16 %v125, %v121
  %v130 = vpack.c.b16 %v126, %v122
  %v199 = vunpack.c.l.b16 %v39
  %v200 = vunpack.c.h.b16 %v39
  %v201 = vunpack.c.l.b16 %v40
  %v202 = vunpack.c.h.b16 %v40
  %v203 = vunpack.c.l.b16 %v41
  %v204 = vunpack.c.h.b16 %v41
  %v205 = vunpack.c.l.b16 %v42
  %v206 = vunpack.c.h.b16 %v42
  %v207 = vunpack.c.l.b16 %v43
  %v208 = vunpack.c.h.b16 %v43
  %v209 = vunpack.c.l.b16 %v44
  %v210 = vunpack.c.h.b16 %v44
  %v211 = vunpack.c.l.b16 %v45
  %v212 = vunpack.c.h.b16 %v45
  %v213 = vunpack.c.l.b16 %v46
  %v214 = vunpack.c.h.b16 %v46
  %v215 = vunpack.c.l.b16 %v47
  %v216 = vunpack.c.h.b16 %v47
  %v217 = vunpack.c.l.b16 %v48
  %v218 = vunpack.c.h.b16 %v48
  %v219 = vunpack.c.l.b16 %v49
  %v220 = vunpack.c.h.b16 %v49
  %v221 = vunpack.c.l.b16 %v50
  %v222 = vunpack.c.h.b16 %v50
  %v223 = vunpack.c.l.b16 %v51
  %v224 = vunpack.c.h.b16 %v51
  %v225 = vunpack.c.l.b16 %v52
  %v226 = vunpack.c.h.b16 %v52
  %v227 = vunpack.c.l.b16 %v53
  %v228 = vunpack.c.h.b16 %v53
  %v229 = vunpack.c.l.b16 %v54
  %v230 = vunpack.c.h.b16 %v54
  %v231 = vunpack.c.l.b16 %v55
  %v232 = vunpack.c.h.b16 %v55
  %v233 = vunpack.c.l.b16 %v56
  %v234 = vunpack.c.h.b16 %v56
  %v235 = vunpack.c.l.b16 %v57
  %v236 = vunpack.c.h.b16 %v57
  %v237 = vunpack.c.l.b16 %v58
  %v238 = vunpack.c.h.b16 %v58
  %v239 = vunpack.c.l.b16 %v59
  %v240 = vunpack.c.h.b16 %v59
  %v241 = vunpack.c.l.b16 %v60
  %v242 = vunpack.c.h.b16 %v60
  %v243 = vunpack.c.l.b16 %v61
  %v244 = vunpack.c.h.b16 %v61
  %v245 = vunpack.c.l.b16 %v62
  %v246 = vunpack.c.h.b16 %v62
  %v247 = vunpack.c.l.b16 %v63
  %v248 = vunpack.c.h.b16 %v63
  %v249 = vunpack.c.l.b16 %v64
  %v250 = vunpack.c.h.b16 %v64
  %v251 = vunpack.c.l.b16 %v65
  %v252 = vunpack.c.h.b16 %v65
  %v253 = vunpack.c.l.b16 %v66
  %v254 = vunpack.c.h.b16 %v66
  %v255 = vunpack.c.l.b16 %v67
  %v256 = vunpack.c.h.b16 %v67
  %v257 = vunpack.c.l.b16 %v68
  %v258 = vunpack.c.h.b16 %v68
  %v259 = vunpack.c.l.b16 %v69
  %v260 = vunpack.c.h.b16 %v69
  %v261 = vunpack.c.l.b16 %v70
  %v262 = vunpack.c.h.b16 %v70
  %v263 = vunpack.c.l.b16 %v71
  %v264 = vunpack.c.h.b16 %v71
  %v265 = vunpack.c.l.b16 %v72
  %v266 = vunpack.c.h.b16 %v72
  %v267 = vunpack.c.l.b16 %v73
  %v268 = vunpack.c.h.b16 %v73
  %v269 = vunpack.c.l.b16 %v74
  %v270 = vunpack.c.h.b16 %v74
  %v271 = vunpack.c.l.b16 %v75
  %v272 = vunpack.c.h.b16 %v75
  %v273 = vunpack.c.l.b16 %v76
  %v274 = vunpack.c.h.b16 %v76
  %v275 = vunpack.c.l.b16 %v77
  %v276 = vunpack.c.h.b16 %v77
  %v277 = vunpack.c.l.b16 %v78
  %v278 = vunpack.c.h.b16 %v78
  %v279 = vunpack.c.l.b16 %v79
  %v280 = vunpack.c.h.b16 %v79
  %v281 = vunpack.c.l.b16 %v80
  %v282 = vunpack.c.h.b16 %v80
  %v283 = vunpack.c.l.b16 %v81
  %v284 = vunpack.c.h.b16 %v81
  %v285 = vunpack.c.l.b16 %v82
  %v286 = vunpack.c.h.b16 %v82
  %v287 = vunpack.c.l.b16 %v83
  %v288 = vunpack.c.h.b16 %v83
  %v289 = vunpack.c.l.b16 %v84
  %v290 = vunpack.c.h.b16 %v84
  %v291 = vunpack.c.l.b16 %v85
  %v292 = vunpack.c.h.b16 %v85
  %v293 = vunpack.c.l.b16 %v86
  %v294 = vunpack.c.h.b16 %v86
  %v295 = vunpack.c.l.b16 %v87
  %v296 = vunpack.c.h.b16 %v87
  %v297 = vunpack.c.l.b16 %v88
  %v298 = vunpack.c.h.b16 %v88
  %v299 = vunpack.c.l.b16 %v89
  %v300 = vunpack.c.h.b16 %v89
  %v301 = vunpack.c.l.b16 %v90
  %v302 = vunpack.c.h.b16 %v90
  %v303 = vunpack.c.l.b16 %v91
  %v304 = vunpack.c.h.b16 %v91
  %v305 = vunpack.c.l.b16 %v92
  %v306 = vunpack.c.h.b16 %v92
  %v307 = vunpack.c.l.b16 %v93
  %v308 = vunpack.c.h.b16 %v93
  %v309 = vunpack.c.l.b16 %v94
  %v310 = vunpack.c.h.b16 %v94
  %v311 = vunpack.c.l.b16 %v95
  %v312 = vunpack.c.h.b16 %v95
  %v313 = vunpack.c.l.b16 %v96
  %v314 = vunpack.c.h.b16 %v96
  %v315 = vunpack.c.l.b16 %v97
  %v316 = vunpack.c.h.b16 %v97
  %v317 = vunpack.c.l.b16 %v98
  %v318 = vunpack.c.h.b16 %v98
  %v319 = vunpack.c.l.b16 %v99
  %v320 = vunpack.c.h.b16 %v99
  %v321 = vunpack.c.l.b16 %v100
  %v322 = vunpack.c.h.b16 %v100
  %v323 = vunpack.c.l.b16 %v101
  %v324 = vunpack.c.h.b16 %v101
  %v325 = vunpack.c.l.b16 %v102
  %v326 = vunpack.c.h.b16 %v102
  %v327 = vpack.c.b16 %v201, %v199
  %v328 = vpack.c.b16 %v202, %v200
  %v329 = vpack.c.b16 %v205, %v203
  %v330 = vpack.c.b16 %v206, %v204
  %v331 = vpack.c.b16 %v209, %v207
  %v332 = vpack.c.b16 %v210, %v208
  %v333 = vpack.c.b16 %v213, %v211
  %v334 = vpack.c.b16 %v214, %v212
  %v335 = vpack.c.b16 %v217, %v215
  %v336 = vpack.c.b16 %v218, %v216
  %v337 = vpack.c.b16 %v221, %v219
  %v338 = vpack.c.b16 %v222, %v220
  %v339 = vpack.c.b16 %v225, %v223
  %v340 = vpack.c.b16 %v226, %v224
  %v341 = vpack.c.b16 %v229, %v227
  %v342 = vpack.c.b16 %v230, %v228
  %v343 = vpack.c.b16 %v233, %v231
  %v344 = vpack.c.b16 %v234, %v232
  %v345 = vpack.c.b16 %v237, %v235
  %v346 = vpack.c.b16 %v238, %v236
  %v347 = vpack.c.b16 %v241, %v239
  %v348 = vpack.c.b16 %v242, %v240
  %v349 = vpack.c.b16 %v245, %v243
  %v350 = vpack.c.b16 %v246, %v244
  %v351 = vpack.c.b16 %v249, %v247
  %v352 = vpack.c.b16 %v250, %v248
  %v353 = vpack.c.b16 %v253, %v251
  %v354 = vpack.c.b16 %v254, %v252
  %v355 = vpack.c.b16 %v257, %v255
  %v356 = vpack.c.b16 %v258, %v256
  %v357 = vpack.c.b16 %v261, %v259
  %v358 = vpack.c.b16 %v262, %v260
  %v359 = vpack.c.b16 %v265, %v263
  %v360 = vpack.c.b16 %v266, %v264
  %v361 = vpack.c.b16 %v269, %v267
  %v362 = vpack.c.b16 %v270, %v268
  %v363 = vpack.c.b16 %v273, %v271
  %v364 = vpack.c.b16 %v274, %v272
  %v365 = vpack.c.b16 %v277, %v275
  %v366 = vpack.c.b16 %v278, %v276
  %v367 = vpack.c.b16 %v281, %v279
  %v368 = vpack.c.b16 %v282, %v280
  %v369 = vpack.c.b16 %v285, %v283
  %v370 = vpack.c.b16 %v286, %v284
  %v371 = vpack.c.b16 %v289, %v287
  %v372 = vpack.c.b16 %v290, %v288
  %v373 = vpack.c.b16 %v293, %v291
  %v374 = vpack.c.b16 %v294, %v292
  %v375 = vpack.c.b16 %v297, %v295
  %v376 = vpack.c.b16 %v298, %v296
  %v377 = vpack.c.b16 %v301, %v299
  %v378 = vpack.c.b16 %v302, %v300
  %v379 = vpack.c.b16 %v305, %v303
  %v380 = vpack.c.b16 %v306, %v304
  %v381 = vpack.c.b16 %v309, %v307
  %v382 = vpack.c.b16 %v310, %v308
  %v383 = vpack.c.b16 %v313, %v311
  %v384 = vpack.c.b16 %v314, %v312
  %v385 = vpack.c.b16 %v317, %v315
  %v386 = vpack.c.b16 %v318, %v316
  %v387 = vpack.c.b16 %v321, %v319
  %v388 = vpack.c.b16 %v322, %v320
  %v389 = vpack.c.b16 %v325, %v323
  %v390 = vpack.c.b16 %v326, %v324
  %455 = vmatprep.subr.bf16.mxu0 %v328
  %456 = vmatpush1.bf16.msra.mxu0 %v327
  %457 = vmatprep.subr.bf16.mxu0 %v330
  %458 = vmatpush1.bf16.msra.mxu0 %v329
  %459 = vmatprep.subr.bf16.mxu0 %v332
  %460 = vmatpush1.bf16.msra.mxu0 %v331
  %461 = vmatprep.subr.bf16.mxu0 %v334
  %462 = vmatpush1.bf16.msra.mxu0 %v333
  %463 = vmatprep.subr.bf16.mxu0 %v336
  %464 = vmatpush1.bf16.msra.mxu0 %v335
  %465 = vmatprep.subr.bf16.mxu0 %v338
  %466 = vmatpush1.bf16.msra.mxu0 %v337
  %467 = vmatprep.subr.bf16.mxu0 %v340
  %468 = vmatpush1.bf16.msra.mxu0 %v339
  %469 = vmatprep.subr.bf16.mxu0 %v342
  %470 = vmatpush1.bf16.msra.mxu0 %v341
  %471 = vmatprep.subr.bf16.mxu0 %v344
  %472 = vmatpush1.bf16.msra.mxu0 %v343
  %473 = vmatprep.subr.bf16.mxu0 %v346
  %474 = vmatpush1.bf16.msra.mxu0 %v345
  %475 = vmatprep.subr.bf16.mxu0 %v348
  %476 = vmatpush1.bf16.msra.mxu0 %v347
  %477 = vmatprep.subr.bf16.mxu0 %v350
  %478 = vmatpush1.bf16.msra.mxu0 %v349
  %479 = vmatprep.subr.bf16.mxu0 %v352
  %480 = vmatpush1.bf16.msra.mxu0 %v351
  %481 = vmatprep.subr.bf16.mxu0 %v354
  %482 = vmatpush1.bf16.msra.mxu0 %v353
  %483 = vmatprep.subr.bf16.mxu0 %v356
  %484 = vmatpush1.bf16.msra.mxu0 %v355
  %485 = vmatprep.subr.bf16.mxu0 %v358
  %486 = vmatpush1.bf16.msra.mxu0 %v357
  %487 = vmatprep.mubr.bf16.mxu0 %v128
  %488 = vmatmul.mubr.bf16.gmra.mrb[0].mxu0 %v127
  %v489 = vpop.f32.mrb[0].mxu0
  %v490 = vadd.f32 %v108, %v489
  %v491 = vpop.f32.mrb[0].mxu0
  %v492 = vadd.f32 %v112, %v491
  %v493 = vpop.f32.mrb[0].mxu0
  %v494 = vadd.f32 %v108, %v493
  %v495 = vpop.f32.mrb[0].mxu0
  %v496 = vadd.f32 %v112, %v495
  %497 = vdwg.mxu0
  %498 = vmatprep.subr.bf16.mxu0 %v360
  %499 = vmatpush1.bf16.msra.mxu0 %v359
  %500 = vmatprep.subr.bf16.mxu0 %v362
  %501 = vmatpush1.bf16.msra.mxu0 %v361
  %502 = vmatprep.subr.bf16.mxu0 %v364
  %503 = vmatpush1.bf16.msra.mxu0 %v363
  %504 = vmatprep.subr.bf16.mxu0 %v366
  %505 = vmatpush1.bf16.msra.mxu0 %v365
  %506 = vmatprep.subr.bf16.mxu0 %v368
  %507 = vmatpush1.bf16.msra.mxu0 %v367
  %508 = vmatprep.subr.bf16.mxu0 %v370
  %509 = vmatpush1.bf16.msra.mxu0 %v369
  %510 = vmatprep.subr.bf16.mxu0 %v372
  %511 = vmatpush1.bf16.msra.mxu0 %v371
  %512 = vmatprep.subr.bf16.mxu0 %v374
  %513 = vmatpush1.bf16.msra.mxu0 %v373
  %514 = vmatprep.subr.bf16.mxu0 %v376
  %515 = vmatpush1.bf16.msra.mxu0 %v375
  %516 = vmatprep.subr.bf16.mxu0 %v378
  %517 = vmatpush1.bf16.msra.mxu0 %v377
  %518 = vmatprep.subr.bf16.mxu0 %v380
  %519 = vmatpush1.bf16.msra.mxu0 %v379
  %520 = vmatprep.subr.bf16.mxu0 %v382
  %521 = vmatpush1.bf16.msra.mxu0 %v381
  %522 = vmatprep.subr.bf16.mxu0 %v384
  %523 = vmatpush1.bf16.msra.mxu0 %v383
  %524 = vmatprep.subr.bf16.mxu0 %v386
  %525 = vmatpush1.bf16.msra.mxu0 %v385
  %526 = vmatprep.subr.bf16.mxu0 %v388
  %527 = vmatpush1.bf16.msra.mxu0 %v387
  %528 = vmatprep.subr.bf16.mxu0 %v390
  %529 = vmatpush1.bf16.msra.mxu0 %v389
  %530 = vmatprep.mubr.bf16.mxu0 %v130
  %531 = vmatmul.mubr.bf16.gmra.mrb[0].mxu0 %v129
  %v532 = vpop.f32.mrb[0].mxu0
  %v533 = vadd.f32 %v490, %v532
  %v534 = vpop.f32.mrb[0].mxu0
  %v535 = vadd.f32 %v492, %v534
  %v536 = vpop.f32.mrb[0].mxu0
  %v537 = vadd.f32 %v494, %v536
  %v538 = vpop.f32.mrb[0].mxu0
  %v539 = vadd.f32 %v496, %v538
  %540 = vdwg.mxu0
  %v541 = vpack.c.bf16 %v537, %v533
  %v542 = vpack.c.bf16 %v539, %v535
  %v545 = vunpack.c.l.b16 %v541
  %v546 = vunpack.c.l.b16 %v542
  %v547 = vunpack.c.h.b16 %v541
  %v548 = vunpack.c.h.b16 %v542
  %v549 = vpack.c.b16 %v546, %v545
  %v550 = vpack.c.b16 %v548, %v547
  %553 = vst [vmem:[%s9] sm:$0xff] %v549
  %554 = vst [vmem:[%s9 + $0x8] sm:$0xff] %v550
  %v555 = vld [vmem:[%s1] sm:$0xff]
  %v556 = vld [vmem:[%s1 + $0x8] sm:$0xff]
  %v557 = vld [vmem:[%s1 + $0x10] sm:$0xff]
  %v558 = vld [vmem:[%s1 + $0x18] sm:$0xff]
  %v559 = vld [vmem:[%s4] sm:$0xff]
  %v560 = vld [vmem:[%s4 + $0x8] sm:$0xff]
  %v561 = vld [vmem:[%s4 + $0x10] sm:$0xff]
  %v562 = vld [vmem:[%s4 + $0x18] sm:$0xff]
  %v563 = vld [vmem:[%s4 + $0x20] sm:$0xff]
  %v564 = vld [vmem:[%s4 + $0x28] sm:$0xff]
  %v565 = vld [vmem:[%s4 + $0x30] sm:$0xff]
  %v566 = vld [vmem:[%s4 + $0x38] sm:$0xff]
  %v567 = vld [vmem:[%s4 + $0x40] sm:$0xff]
  %v568 = vld [vmem:[%s4 + $0x48] sm:$0xff]
  %v569 = vld [vmem:[%s4 + $0x50] sm:$0xff]
  %v570 = vld [vmem:[%s4 + $0x58] sm:$0xff]
  %v571 = vld [vmem:[%s4 + $0x60] sm:$0xff]
  %v572 = vld [vmem:[%s4 + $0x68] sm:$0xff]
  %v573 = vld [vmem:[%s4 + $0x70] sm:$0xff]
  %v574 = vld [vmem:[%s4 + $0x78] sm:$0xff]
  %v575 = vld [vmem:[%s4 + $0x80] sm:$0xff]
  %v576 = vld [vmem:[%s4 + $0x88] sm:$0xff]
  %v577 = vld [vmem:[%s4 + $0x90] sm:$0xff]
  %v578 = vld [vmem:[%s4 + $0x98] sm:$0xff]
  %v579 = vld [vmem:[%s4 + $0xa0] sm:$0xff]
  %v580 = vld [vmem:[%s4 + $0xa8] sm:$0xff]
  %v581 = vld [vmem:[%s4 + $0xb0] sm:$0xff]
  %v582 = vld [vmem:[%s4 + $0xb8] sm:$0xff]
  %v583 = vld [vmem:[%s4 + $0xc0] sm:$0xff]
  %v584 = vld [vmem:[%s4 + $0xc8] sm:$0xff]
  %v585 = vld [vmem:[%s4 + $0xd0] sm:$0xff]
  %v586 = vld [vmem:[%s4 + $0xd8] sm:$0xff]
  %v587 = vld [vmem:[%s4 + $0xe0] sm:$0xff]
  %v588 = vld [vmem:[%s4 + $0xe8] sm:$0xff]
  %v589 = vld [vmem:[%s4 + $0xf0] sm:$0xff]
  %v590 = vld [vmem:[%s4 + $0xf8] sm:$0xff]
  %v591 = vld [vmem:[%s4 + $0x100] sm:$0xff]
  %v592 = vld [vmem:[%s4 + $0x108] sm:$0xff]
  %v593 = vld [vmem:[%s4 + $0x110] sm:$0xff]
  %v594 = vld [vmem:[%s4 + $0x118] sm:$0xff]
  %v595 = vld [vmem:[%s4 + $0x120] sm:$0xff]
  %v596 = vld [vmem:[%s4 + $0x128] sm:$0xff]
  %v597 = vld [vmem:[%s4 + $0x130] sm:$0xff]
  %v598 = vld [vmem:[%s4 + $0x138] sm:$0xff]
  %v599 = vld [vmem:[%s4 + $0x140] sm:$0xff]
  %v600 = vld [vmem:[%s4 + $0x148] sm:$0xff]
  %v601 = vld [vmem:[%s4 + $0x150] sm:$0xff]
  %v602 = vld [vmem:[%s4 + $0x158] sm:$0xff]
  %v603 = vld [vmem:[%s4 + $0x160] sm:$0xff]
  %v604 = vld [vmem:[%s4 + $0x168] sm:$0xff]
  %v605 = vld [vmem:[%s4 + $0x170] sm:$0xff]
  %v606 = vld [vmem:[%s4 + $0x178] sm:$0xff]
  %v607 = vld [vmem:[%s4 + $0x180] sm:$0xff]
  %v608 = vld [vmem:[%s4 + $0x188] sm:$0xff]
  %v609 = vld [vmem:[%s4 + $0x190] sm:$0xff]
  %v610 = vld [vmem:[%s4 + $0x198] sm:$0xff]
  %v611 = vld [vmem:[%s4 + $0x1a0] sm:$0xff]
  %v612 = vld [vmem:[%s4 + $0x1a8] sm:$0xff]
  %v613 = vld [vmem:[%s4 + $0x1b0] sm:$0xff]
  %v614 = vld [vmem:[%s4 + $0x1b8] sm:$0xff]
  %v615 = vld [vmem:[%s4 + $0x1c0] sm:$0xff]
  %v616 = vld [vmem:[%s4 + $0x1c8] sm:$0xff]
  %v617 = vld [vmem:[%s4 + $0x1d0] sm:$0xff]
  %v618 = vld [vmem:[%s4 + $0x1d8] sm:$0xff]
  %v619 = vld [vmem:[%s4 + $0x1e0] sm:$0xff]
  %v620 = vld [vmem:[%s4 + $0x1e8] sm:$0xff]
  %v621 = vld [vmem:[%s4 + $0x1f0] sm:$0xff]
  %v622 = vld [vmem:[%s4 + $0x1f8] sm:$0xff]
  %v623 = vld [vmem:[%s7] sm:$0x3]
  %v625 = vlaneseq
  %v626 = vshrl.u32 %v625, 7
  %v627 = vsub.s32 0, %v626
  %v628 = vrot.slane %v623, %v627
  %v629 = vlaneseq
  %v630 = vshrl.u32 %v629, 7
  %v631 = vsub.s32 1, %v630
  %v632 = vrot.slane %v623, %v631
  %v639 = vunpack.c.l.b16 %v555
  %v640 = vunpack.c.h.b16 %v555
  %v641 = vunpack.c.l.b16 %v556
  %v642 = vunpack.c.h.b16 %v556
  %v643 = vunpack.c.l.b16 %v557
  %v644 = vunpack.c.h.b16 %v557
  %v645 = vunpack.c.l.b16 %v558
  %v646 = vunpack.c.h.b16 %v558
  %v647 = vpack.c.b16 %v643, %v639
  %v648 = vpack.c.b16 %v644, %v640
  %v649 = vpack.c.b16 %v645, %v641
  %v650 = vpack.c.b16 %v646, %v642
  %v719 = vunpack.c.l.b16 %v559
  %v720 = vunpack.c.h.b16 %v559
  %v721 = vunpack.c.l.b16 %v560
  %v722 = vunpack.c.h.b16 %v560
  %v723 = vunpack.c.l.b16 %v561
  %v724 = vunpack.c.h.b16 %v561
  %v725 = vunpack.c.l.b16 %v562
  %v726 = vunpack.c.h.b16 %v562
  %v727 = vunpack.c.l.b16 %v563
  %v728 = vunpack.c.h.b16 %v563
  %v729 = vunpack.c.l.b16 %v564
  %v730 = vunpack.c.h.b16 %v564
  %v731 = vunpack.c.l.b16 %v565
  %v732 = vunpack.c.h.b16 %v565
  %v733 = vunpack.c.l.b16 %v566
  %v734 = vunpack.c.h.b16 %v566
  %v735 = vunpack.c.l.b16 %v567
  %v736 = vunpack.c.h.b16 %v567
  %v737 = vunpack.c.l.b16 %v568
  %v738 = vunpack.c.h.b16 %v568
  %v739 = vunpack.c.l.b16 %v569
  %v740 = vunpack.c.h.b16 %v569
  %v741 = vunpack.c.l.b16 %v570
  %v742 = vunpack.c.h.b16 %v570
  %v743 = vunpack.c.l.b16 %v571
  %v744 = vunpack.c.h.b16 %v571
  %v745 = vunpack.c.l.b16 %v572
  %v746 = vunpack.c.h.b16 %v572
  %v747 = vunpack.c.l.b16 %v573
  %v748 = vunpack.c.h.b16 %v573
  %v749 = vunpack.c.l.b16 %v574
  %v750 = vunpack.c.h.b16 %v574
  %v751 = vunpack.c.l.b16 %v575
  %v752 = vunpack.c.h.b16 %v575
  %v753 = vunpack.c.l.b16 %v576
  %v754 = vunpack.c.h.b16 %v576
  %v755 = vunpack.c.l.b16 %v577
  %v756 = vunpack.c.h.b16 %v577
  %v757 = vunpack.c.l.b16 %v578
  %v758 = vunpack.c.h.b16 %v578
  %v759 = vunpack.c.l.b16 %v579
  %v760 = vunpack.c.h.b16 %v579
  %v761 = vunpack.c.l.b16 %v580
  %v762 = vunpack.c.h.b16 %v580
  %v763 = vunpack.c.l.b16 %v581
  %v764 = vunpack.c.h.b16 %v581
  %v765 = vunpack.c.l.b16 %v582
  %v766 = vunpack.c.h.b16 %v582
  %v767 = vunpack.c.l.b16 %v583
  %v768 = vunpack.c.h.b16 %v583
  %v769 = vunpack.c.l.b16 %v584
  %v770 = vunpack.c.h.b16 %v584
  %v771 = vunpack.c.l.b16 %v585
  %v772 = vunpack.c.h.b16 %v585
  %v773 = vunpack.c.l.b16 %v586
  %v774 = vunpack.c.h.b16 %v586
  %v775 = vunpack.c.l.b16 %v587
  %v776 = vunpack.c.h.b16 %v587
  %v777 = vunpack.c.l.b16 %v588
  %v778 = vunpack.c.h.b16 %v588
  %v779 = vunpack.c.l.b16 %v589
  %v780 = vunpack.c.h.b16 %v589
  %v781 = vunpack.c.l.b16 %v590
  %v782 = vunpack.c.h.b16 %v590
  %v783 = vunpack.c.l.b16 %v591
  %v784 = vunpack.c.h.b16 %v591
  %v785 = vunpack.c.l.b16 %v592
  %v786 = vunpack.c.h.b16 %v592
  %v787 = vunpack.c.l.b16 %v593
  %v788 = vunpack.c.h.b16 %v593
  %v789 = vunpack.c.l.b16 %v594
  %v790 = vunpack.c.h.b16 %v594
  %v791 = vunpack.c.l.b16 %v595
  %v792 = vunpack.c.h.b16 %v595
  %v793 = vunpack.c.l.b16 %v596
  %v794 = vunpack.c.h.b16 %v596
  %v795 = vunpack.c.l.b16 %v597
  %v796 = vunpack.c.h.b16 %v597
  %v797 = vunpack.c.l.b16 %v598
  %v798 = vunpack.c.h.b16 %v598
  %v799 = vunpack.c.l.b16 %v599
  %v800 = vunpack.c.h.b16 %v599
  %v801 = vunpack.c.l.b16 %v600
  %v802 = vunpack.c.h.b16 %v600
  %v803 = vunpack.c.l.b16 %v601
  %v804 = vunpack.c.h.b16 %v601
  %v805 = vunpack.c.l.b16 %v602
  %v806 = vunpack.c.h.b16 %v602
  %v807 = vunpack.c.l.b16 %v603
  %v808 = vunpack.c.h.b16 %v603
  %v809 = vunpack.c.l.b16 %v604
  %v810 = vunpack.c.h.b16 %v604
  %v811 = vunpack.c.l.b16 %v605
  %v812 = vunpack.c.h.b16 %v605
  %v813 = vunpack.c.l.b16 %v606
  %v814 = vunpack.c.h.b16 %v606
  %v815 = vunpack.c.l.b16 %v607
  %v816 = vunpack.c.h.b16 %v607
  %v817 = vunpack.c.l.b16 %v608
  %v818 = vunpack.c.h.b16 %v608
  %v819 = vunpack.c.l.b16 %v609
  %v820 = vunpack.c.h.b16 %v609
  %v821 = vunpack.c.l.b16 %v610
  %v822 = vunpack.c.h.b16 %v610
  %v823 = vunpack.c.l.b16 %v611
  %v824 = vunpack.c.h.b16 %v611
  %v825 = vunpack.c.l.b16 %v612
  %v826 = vunpack.c.h.b16 %v612
  %v827 = vunpack.c.l.b16 %v613
  %v828 = vunpack.c.h.b16 %v613
  %v829 = vunpack.c.l.b16 %v614
  %v830 = vunpack.c.h.b16 %v614
  %v831 = vunpack.c.l.b16 %v615
  %v832 = vunpack.c.h.b16 %v615
  %v833 = vunpack.c.l.b16 %v616
  %v834 = vunpack.c.h.b16 %v616
  %v835 = vunpack.c.l.b16 %v617
  %v836 = vunpack.c.h.b16 %v617
  %v837 = vunpack.c.l.b16 %v618
  %v838 = vunpack.c.h.b16 %v618
  %v839 = vunpack.c.l.b16 %v619
  %v840 = vunpack.c.h.b16 %v619
  %v841 = vunpack.c.l.b16 %v620
  %v842 = vunpack.c.h.b16 %v620
  %v843 = vunpack.c.l.b16 %v621
  %v844 = vunpack.c.h.b16 %v621
  %v845 = vunpack.c.l.b16 %v622
  %v846 = vunpack.c.h.b16 %v622
  %v847 = vpack.c.b16 %v721, %v719
  %v848 = vpack.c.b16 %v722, %v720
  %v849 = vpack.c.b16 %v725, %v723
  %v850 = vpack.c.b16 %v726, %v724
  %v851 = vpack.c.b16 %v729, %v727
  %v852 = vpack.c.b16 %v730, %v728
  %v853 = vpack.c.b16 %v733, %v731
  %v854 = vpack.c.b16 %v734, %v732
  %v855 = vpack.c.b16 %v737, %v735
  %v856 = vpack.c.b16 %v738, %v736
  %v857 = vpack.c.b16 %v741, %v739
  %v858 = vpack.c.b16 %v742, %v740
  %v859 = vpack.c.b16 %v745, %v743
  %v860 = vpack.c.b16 %v746, %v744
  %v861 = vpack.c.b16 %v749, %v747
  %v862 = vpack.c.b16 %v750, %v748
  %v863 = vpack.c.b16 %v753, %v751
  %v864 = vpack.c.b16 %v754, %v752
  %v865 = vpack.c.b16 %v757, %v755
  %v866 = vpack.c.b16 %v758, %v756
  %v867 = vpack.c.b16 %v761, %v759
  %v868 = vpack.c.b16 %v762, %v760
  %v869 = vpack.c.b16 %v765, %v763
  %v870 = vpack.c.b16 %v766, %v764
  %v871 = vpack.c.b16 %v769, %v767
  %v872 = vpack.c.b16 %v770, %v768
  %v873 = vpack.c.b16 %v773, %v771
  %v874 = vpack.c.b16 %v774, %v772
  %v875 = vpack.c.b16 %v777, %v775
  %v876 = vpack.c.b16 %v778, %v776
  %v877 = vpack.c.b16 %v781, %v779
  %v878 = vpack.c.b16 %v782, %v780
  %v879 = vpack.c.b16 %v785, %v783
  %v880 = vpack.c.b16 %v786, %v784
  %v881 = vpack.c.b16 %v789, %v787
  %v882 = vpack.c.b16 %v790, %v788
  %v883 = vpack.c.b16 %v793, %v791
  %v884 = vpack.c.b16 %v794, %v792
  %v885 = vpack.c.b16 %v797, %v795
  %v886 = vpack.c.b16 %v798, %v796
  %v887 = vpack.c.b16 %v801, %v799
  %v888 = vpack.c.b16 %v802, %v800
  %v889 = vpack.c.b16 %v805, %v803
  %v890 = vpack.c.b16 %v806, %v804
  %v891 = vpack.c.b16 %v809, %v807
  %v892 = vpack.c.b16 %v810, %v808
  %v893 = vpack.c.b16 %v813, %v811
  %v894 = vpack.c.b16 %v814, %v812
  %v895 = vpack.c.b16 %v817, %v815
  %v896 = vpack.c.b16 %v818, %v816
  %v897 = vpack.c.b16 %v821, %v819
  %v898 = vpack.c.b16 %v822, %v820
  %v899 = vpack.c.b16 %v825, %v823
  %v900 = vpack.c.b16 %v826, %v824
  %v901 = vpack.c.b16 %v829, %v827
  %v902 = vpack.c.b16 %v830, %v828
  %v903 = vpack.c.b16 %v833, %v831
  %v904 = vpack.c.b16 %v834, %v832
  %v905 = vpack.c.b16 %v837, %v835
  %v906 = vpack.c.b16 %v838, %v836
  %v907 = vpack.c.b16 %v841, %v839
  %v908 = vpack.c.b16 %v842, %v840
  %v909 = vpack.c.b16 %v845, %v843
  %v910 = vpack.c.b16 %v846, %v844
  %975 = vmatprep.subr.bf16.mxu0 %v848
  %976 = vmatpush1.bf16.msra.mxu0 %v847
  %977 = vmatprep.subr.bf16.mxu0 %v850
  %978 = vmatpush1.bf16.msra.mxu0 %v849
  %979 = vmatprep.subr.bf16.mxu0 %v852
  %980 = vmatpush1.bf16.msra.mxu0 %v851
  %981 = vmatprep.subr.bf16.mxu0 %v854
  %982 = vmatpush1.bf16.msra.mxu0 %v853
  %983 = vmatprep.subr.bf16.mxu0 %v856
  %984 = vmatpush1.bf16.msra.mxu0 %v855
  %985 = vmatprep.subr.bf16.mxu0 %v858
  %986 = vmatpush1.bf16.msra.mxu0 %v857
  %987 = vmatprep.subr.bf16.mxu0 %v860
  %988 = vmatpush1.bf16.msra.mxu0 %v859
  %989 = vmatprep.subr.bf16.mxu0 %v862
  %990 = vmatpush1.bf16.msra.mxu0 %v861
  %991 = vmatprep.subr.bf16.mxu0 %v864
  %992 = vmatpush1.bf16.msra.mxu0 %v863
  %993 = vmatprep.subr.bf16.mxu0 %v866
  %994 = vmatpush1.bf16.msra.mxu0 %v865
  %995 = vmatprep.subr.bf16.mxu0 %v868
  %996 = vmatpush1.bf16.msra.mxu0 %v867
  %997 = vmatprep.subr.bf16.mxu0 %v870
  %998 = vmatpush1.bf16.msra.mxu0 %v869
  %999 = vmatprep.subr.bf16.mxu0 %v872
  %1000 = vmatpush1.bf16.msra.mxu0 %v871
  %1001 = vmatprep.subr.bf16.mxu0 %v874
  %1002 = vmatpush1.bf16.msra.mxu0 %v873
  %1003 = vmatprep.subr.bf16.mxu0 %v876
  %1004 = vmatpush1.bf16.msra.mxu0 %v875
  %1005 = vmatprep.subr.bf16.mxu0 %v878
  %1006 = vmatpush1.bf16.msra.mxu0 %v877
  %1007 = vmatprep.mubr.bf16.mxu0 %v648
  %1008 = vmatmul.mubr.bf16.gmra.mrb[0].mxu0 %v647
  %v1009 = vpop.f32.mrb[0].mxu0
  %v1010 = vadd.f32 %v628, %v1009
  %v1011 = vpop.f32.mrb[0].mxu0
  %v1012 = vadd.f32 %v632, %v1011
  %v1013 = vpop.f32.mrb[0].mxu0
  %v1014 = vadd.f32 %v628, %v1013
  %v1015 = vpop.f32.mrb[0].mxu0
  %v1016 = vadd.f32 %v632, %v1015
  %1017 = vdwg.mxu0
  %1018 = vmatprep.subr.bf16.mxu0 %v880
  %1019 = vmatpush1.bf16.msra.mxu0 %v879
  %1020 = vmatprep.subr.bf16.mxu0 %v882
  %1021 = vmatpush1.bf16.msra.mxu0 %v881
  %1022 = vmatprep.subr.bf16.mxu0 %v884
  %1023 = vmatpush1.bf16.msra.mxu0 %v883
  %1024 = vmatprep.subr.bf16.mxu0 %v886
  %1025 = vmatpush1.bf16.msra.mxu0 %v885
  %1026 = vmatprep.subr.bf16.mxu0 %v888
  %1027 = vmatpush1.bf16.msra.mxu0 %v887
  %1028 = vmatprep.subr.bf16.mxu0 %v890
  %1029 = vmatpush1.bf16.msra.mxu0 %v889
  %1030 = vmatprep.subr.bf16.mxu0 %v892
  %1031 = vmatpush1.bf16.msra.mxu0 %v891
  %1032 = vmatprep.subr.bf16.mxu0 %v894
  %1033 = vmatpush1.bf16.msra.mxu0 %v893
  %1034 = vmatprep.subr.bf16.mxu0 %v896
  %1035 = vmatpush1.bf16.msra.mxu0 %v895
  %1036 = vmatprep.subr.bf16.mxu0 %v898
  %1037 = vmatpush1.bf16.msra.mxu0 %v897
  %1038 = vmatprep.subr.bf16.mxu0 %v900
  %1039 = vmatpush1.bf16.msra.mxu0 %v899
  %1040 = vmatprep.subr.bf16.mxu0 %v902
  %1041 = vmatpush1.bf16.msra.mxu0 %v901
  %1042 = vmatprep.subr.bf16.mxu0 %v904
  %1043 = vmatpush1.bf16.msra.mxu0 %v903
  %1044 = vmatprep.subr.bf16.mxu0 %v906
  %1045 = vmatpush1.bf16.msra.mxu0 %v905
  %1046 = vmatprep.subr.bf16.mxu0 %v908
  %1047 = vmatpush1.bf16.msra.mxu0 %v907
  %1048 = vmatprep.subr.bf16.mxu0 %v910
  %1049 = vmatpush1.bf16.msra.mxu0 %v909
  %1050 = vmatprep.mubr.bf16.mxu0 %v650
  %1051 = vmatmul.mubr.bf16.gmra.mrb[0].mxu0 %v649
  %v1052 = vpop.f32.mrb[0].mxu0
  %v1053 = vadd.f32 %v1010, %v1052
  %v1054 = vpop.f32.mrb[0].mxu0
  %v1055 = vadd.f32 %v1012, %v1054
  %v1056 = vpop.f32.mrb[0].mxu0
  %v1057 = vadd.f32 %v1014, %v1056
  %v1058 = vpop.f32.mrb[0].mxu0
  %v1059 = vadd.f32 %v1016, %v1058
  %1060 = vdwg.mxu0
  %v1061 = vpack.c.bf16 %v1057, %v1053
  %v1062 = vpack.c.bf16 %v1059, %v1055
  %v1065 = vunpack.c.l.b16 %v1061
  %v1066 = vunpack.c.l.b16 %v1062
  %v1067 = vunpack.c.h.b16 %v1061
  %v1068 = vunpack.c.h.b16 %v1062
  %v1069 = vpack.c.b16 %v1066, %v1065
  %v1070 = vpack.c.b16 %v1068, %v1067
  %1073 = vst [vmem:[%s10] sm:$0xff] %v1069
  %1074 = vst [vmem:[%s10 + $0x8] sm:$0xff] %v1070
  %v1075 = vld [vmem:[%s2] sm:$0xff]
  %v1076 = vld [vmem:[%s2 + $0x8] sm:$0xff]
  %v1077 = vld [vmem:[%s2 + $0x10] sm:$0xff]
  %v1078 = vld [vmem:[%s2 + $0x18] sm:$0xff]
  %v1079 = vld [vmem:[%s5] sm:$0xff]
  %v1080 = vld [vmem:[%s5 + $0x8] sm:$0xff]
  %v1081 = vld [vmem:[%s5 + $0x10] sm:$0xff]
  %v1082 = vld [vmem:[%s5 + $0x18] sm:$0xff]
  %v1083 = vld [vmem:[%s5 + $0x20] sm:$0xff]
  %v1084 = vld [vmem:[%s5 + $0x28] sm:$0xff]
  %v1085 = vld [vmem:[%s5 + $0x30] sm:$0xff]
  %v1086 = vld [vmem:[%s5 + $0x38] sm:$0xff]
  %v1087 = vld [vmem:[%s5 + $0x40] sm:$0xff]
  %v1088 = vld [vmem:[%s5 + $0x48] sm:$0xff]
  %v1089 = vld [vmem:[%s5 + $0x50] sm:$0xff]
  %v1090 = vld [vmem:[%s5 + $0x58] sm:$0xff]
  %v1091 = vld [vmem:[%s5 + $0x60] sm:$0xff]
  %v1092 = vld [vmem:[%s5 + $0x68] sm:$0xff]
  %v1093 = vld [vmem:[%s5 + $0x70] sm:$0xff]
  %v1094 = vld [vmem:[%s5 + $0x78] sm:$0xff]
  %v1095 = vld [vmem:[%s5 + $0x80] sm:$0xff]
  %v1096 = vld [vmem:[%s5 + $0x88] sm:$0xff]
  %v1097 = vld [vmem:[%s5 + $0x90] sm:$0xff]
  %v1098 = vld [vmem:[%s5 + $0x98] sm:$0xff]
  %v1099 = vld [vmem:[%s5 + $0xa0] sm:$0xff]
  %v1100 = vld [vmem:[%s5 + $0xa8] sm:$0xff]
  %v1101 = vld [vmem:[%s5 + $0xb0] sm:$0xff]
  %v1102 = vld [vmem:[%s5 + $0xb8] sm:$0xff]
  %v1103 = vld [vmem:[%s5 + $0xc0] sm:$0xff]
  %v1104 = vld [vmem:[%s5 + $0xc8] sm:$0xff]
  %v1105 = vld [vmem:[%s5 + $0xd0] sm:$0xff]
  %v1106 = vld [vmem:[%s5 + $0xd8] sm:$0xff]
  %v1107 = vld [vmem:[%s5 + $0xe0] sm:$0xff]
  %v1108 = vld [vmem:[%s5 + $0xe8] sm:$0xff]
  %v1109 = vld [vmem:[%s5 + $0xf0] sm:$0xff]
  %v1110 = vld [vmem:[%s5 + $0xf8] sm:$0xff]
  %v1111 = vld [vmem:[%s5 + $0x100] sm:$0xff]
  %v1112 = vld [vmem:[%s5 + $0x108] sm:$0xff]
  %v1113 = vld [vmem:[%s5 + $0x110] sm:$0xff]
  %v1114 = vld [vmem:[%s5 + $0x118] sm:$0xff]
  %v1115 = vld [vmem:[%s5 + $0x120] sm:$0xff]
  %v1116 = vld [vmem:[%s5 + $0x128] sm:$0xff]
  %v1117 = vld [vmem:[%s5 + $0x130] sm:$0xff]
  %v1118 = vld [vmem:[%s5 + $0x138] sm:$0xff]
  %v1119 = vld [vmem:[%s5 + $0x140] sm:$0xff]
  %v1120 = vld [vmem:[%s5 + $0x148] sm:$0xff]
  %v1121 = vld [vmem:[%s5 + $0x150] sm:$0xff]
  %v1122 = vld [vmem:[%s5 + $0x158] sm:$0xff]
  %v1123 = vld [vmem:[%s5 + $0x160] sm:$0xff]
  %v1124 = vld [vmem:[%s5 + $0x168] sm:$0xff]
  %v1125 = vld [vmem:[%s5 + $0x170] sm:$0xff]
  %v1126 = vld [vmem:[%s5 + $0x178] sm:$0xff]
  %v1127 = vld [vmem:[%s5 + $0x180] sm:$0xff]
  %v1128 = vld [vmem:[%s5 + $0x188] sm:$0xff]
  %v1129 = vld [vmem:[%s5 + $0x190] sm:$0xff]
  %v1130 = vld [vmem:[%s5 + $0x198] sm:$0xff]
  %v1131 = vld [vmem:[%s5 + $0x1a0] sm:$0xff]
  %v1132 = vld [vmem:[%s5 + $0x1a8] sm:$0xff]
  %v1133 = vld [vmem:[%s5 + $0x1b0] sm:$0xff]
  %v1134 = vld [vmem:[%s5 + $0x1b8] sm:$0xff]
  %v1135 = vld [vmem:[%s5 + $0x1c0] sm:$0xff]
  %v1136 = vld [vmem:[%s5 + $0x1c8] sm:$0xff]
  %v1137 = vld [vmem:[%s5 + $0x1d0] sm:$0xff]
  %v1138 = vld [vmem:[%s5 + $0x1d8] sm:$0xff]
  %v1139 = vld [vmem:[%s5 + $0x1e0] sm:$0xff]
  %v1140 = vld [vmem:[%s5 + $0x1e8] sm:$0xff]
  %v1141 = vld [vmem:[%s5 + $0x1f0] sm:$0xff]
  %v1142 = vld [vmem:[%s5 + $0x1f8] sm:$0xff]
  %v1143 = vld [vmem:[%s8] sm:$0x3]
  %v1145 = vlaneseq
  %v1146 = vshrl.u32 %v1145, 7
  %v1147 = vsub.s32 0, %v1146
  %v1148 = vrot.slane %v1143, %v1147
  %v1149 = vlaneseq
  %v1150 = vshrl.u32 %v1149, 7
  %v1151 = vsub.s32 1, %v1150
  %v1152 = vrot.slane %v1143, %v1151
  %v1159 = vunpack.c.l.b16 %v1075
  %v1160 = vunpack.c.h.b16 %v1075
  %v1161 = vunpack.c.l.b16 %v1076
  %v1162 = vunpack.c.h.b16 %v1076
  %v1163 = vunpack.c.l.b16 %v1077
  %v1164 = vunpack.c.h.b16 %v1077
  %v1165 = vunpack.c.l.b16 %v1078
  %v1166 = vunpack.c.h.b16 %v1078
  %v1167 = vpack.c.b16 %v1163, %v1159
  %v1168 = vpack.c.b16 %v1164, %v1160
  %v1169 = vpack.c.b16 %v1165, %v1161
  %v1170 = vpack.c.b16 %v1166, %v1162
  %v1239 = vunpack.c.l.b16 %v1079
  %v1240 = vunpack.c.h.b16 %v1079
  %v1241 = vunpack.c.l.b16 %v1080
  %v1242 = vunpack.c.h.b16 %v1080
  %v1243 = vunpack.c.l.b16 %v1081
  %v1244 = vunpack.c.h.b16 %v1081
  %v1245 = vunpack.c.l.b16 %v1082
  %v1246 = vunpack.c.h.b16 %v1082
  %v1247 = vunpack.c.l.b16 %v1083
  %v1248 = vunpack.c.h.b16 %v1083
  %v1249 = vunpack.c.l.b16 %v1084
  %v1250 = vunpack.c.h.b16 %v1084
  %v1251 = vunpack.c.l.b16 %v1085
  %v1252 = vunpack.c.h.b16 %v1085
  %v1253 = vunpack.c.l.b16 %v1086
  %v1254 = vunpack.c.h.b16 %v1086
  %v1255 = vunpack.c.l.b16 %v1087
  %v1256 = vunpack.c.h.b16 %v1087
  %v1257 = vunpack.c.l.b16 %v1088
  %v1258 = vunpack.c.h.b16 %v1088
  %v1259 = vunpack.c.l.b16 %v1089
  %v1260 = vunpack.c.h.b16 %v1089
  %v1261 = vunpack.c.l.b16 %v1090
  %v1262 = vunpack.c.h.b16 %v1090
  %v1263 = vunpack.c.l.b16 %v1091
  %v1264 = vunpack.c.h.b16 %v1091
  %v1265 = vunpack.c.l.b16 %v1092
  %v1266 = vunpack.c.h.b16 %v1092
  %v1267 = vunpack.c.l.b16 %v1093
  %v1268 = vunpack.c.h.b16 %v1093
  %v1269 = vunpack.c.l.b16 %v1094
  %v1270 = vunpack.c.h.b16 %v1094
  %v1271 = vunpack.c.l.b16 %v1095
  %v1272 = vunpack.c.h.b16 %v1095
  %v1273 = vunpack.c.l.b16 %v1096
  %v1274 = vunpack.c.h.b16 %v1096
  %v1275 = vunpack.c.l.b16 %v1097
  %v1276 = vunpack.c.h.b16 %v1097
  %v1277 = vunpack.c.l.b16 %v1098
  %v1278 = vunpack.c.h.b16 %v1098
  %v1279 = vunpack.c.l.b16 %v1099
  %v1280 = vunpack.c.h.b16 %v1099
  %v1281 = vunpack.c.l.b16 %v1100
  %v1282 = vunpack.c.h.b16 %v1100
  %v1283 = vunpack.c.l.b16 %v1101
  %v1284 = vunpack.c.h.b16 %v1101
  %v1285 = vunpack.c.l.b16 %v1102
  %v1286 = vunpack.c.h.b16 %v1102
  %v1287 = vunpack.c.l.b16 %v1103
  %v1288 = vunpack.c.h.b16 %v1103
  %v1289 = vunpack.c.l.b16 %v1104
  %v1290 = vunpack.c.h.b16 %v1104
  %v1291 = vunpack.c.l.b16 %v1105
  %v1292 = vunpack.c.h.b16 %v1105
  %v1293 = vunpack.c.l.b16 %v1106
  %v1294 = vunpack.c.h.b16 %v1106
  %v1295 = vunpack.c.l.b16 %v1107
  %v1296 = vunpack.c.h.b16 %v1107
  %v1297 = vunpack.c.l.b16 %v1108
  %v1298 = vunpack.c.h.b16 %v1108
  %v1299 = vunpack.c.l.b16 %v1109
  %v1300 = vunpack.c.h.b16 %v1109
  %v1301 = vunpack.c.l.b16 %v1110
  %v1302 = vunpack.c.h.b16 %v1110
  %v1303 = vunpack.c.l.b16 %v1111
  %v1304 = vunpack.c.h.b16 %v1111
  %v1305 = vunpack.c.l.b16 %v1112
  %v1306 = vunpack.c.h.b16 %v1112
  %v1307 = vunpack.c.l.b16 %v1113
  %v1308 = vunpack.c.h.b16 %v1113
  %v1309 = vunpack.c.l.b16 %v1114
  %v1310 = vunpack.c.h.b16 %v1114
  %v1311 = vunpack.c.l.b16 %v1115
  %v1312 = vunpack.c.h.b16 %v1115
  %v1313 = vunpack.c.l.b16 %v1116
  %v1314 = vunpack.c.h.b16 %v1116
  %v1315 = vunpack.c.l.b16 %v1117
  %v1316 = vunpack.c.h.b16 %v1117
  %v1317 = vunpack.c.l.b16 %v1118
  %v1318 = vunpack.c.h.b16 %v1118
  %v1319 = vunpack.c.l.b16 %v1119
  %v1320 = vunpack.c.h.b16 %v1119
  %v1321 = vunpack.c.l.b16 %v1120
  %v1322 = vunpack.c.h.b16 %v1120
  %v1323 = vunpack.c.l.b16 %v1121
  %v1324 = vunpack.c.h.b16 %v1121
  %v1325 = vunpack.c.l.b16 %v1122
  %v1326 = vunpack.c.h.b16 %v1122
  %v1327 = vunpack.c.l.b16 %v1123
  %v1328 = vunpack.c.h.b16 %v1123
  %v1329 = vunpack.c.l.b16 %v1124
  %v1330 = vunpack.c.h.b16 %v1124
  %v1331 = vunpack.c.l.b16 %v1125
  %v1332 = vunpack.c.h.b16 %v1125
  %v1333 = vunpack.c.l.b16 %v1126
  %v1334 = vunpack.c.h.b16 %v1126
  %v1335 = vunpack.c.l.b16 %v1127
  %v1336 = vunpack.c.h.b16 %v1127
  %v1337 = vunpack.c.l.b16 %v1128
  %v1338 = vunpack.c.h.b16 %v1128
  %v1339 = vunpack.c.l.b16 %v1129
  %v1340 = vunpack.c.h.b16 %v1129
  %v1341 = vunpack.c.l.b16 %v1130
  %v1342 = vunpack.c.h.b16 %v1130
  %v1343 = vunpack.c.l.b16 %v1131
  %v1344 = vunpack.c.h.b16 %v1131
  %v1345 = vunpack.c.l.b16 %v1132
  %v1346 = vunpack.c.h.b16 %v1132
  %v1347 = vunpack.c.l.b16 %v1133
  %v1348 = vunpack.c.h.b16 %v1133
  %v1349 = vunpack.c.l.b16 %v1134
  %v1350 = vunpack.c.h.b16 %v1134
  %v1351 = vunpack.c.l.b16 %v1135
  %v1352 = vunpack.c.h.b16 %v1135
  %v1353 = vunpack.c.l.b16 %v1136
  %v1354 = vunpack.c.h.b16 %v1136
  %v1355 = vunpack.c.l.b16 %v1137
  %v1356 = vunpack.c.h.b16 %v1137
  %v1357 = vunpack.c.l.b16 %v1138
  %v1358 = vunpack.c.h.b16 %v1138
  %v1359 = vunpack.c.l.b16 %v1139
  %v1360 = vunpack.c.h.b16 %v1139
  %v1361 = vunpack.c.l.b16 %v1140
  %v1362 = vunpack.c.h.b16 %v1140
  %v1363 = vunpack.c.l.b16 %v1141
  %v1364 = vunpack.c.h.b16 %v1141
  %v1365 = vunpack.c.l.b16 %v1142
  %v1366 = vunpack.c.h.b16 %v1142
  %v1367 = vpack.c.b16 %v1241, %v1239
  %v1368 = vpack.c.b16 %v1242, %v1240
  %v1369 = vpack.c.b16 %v1245, %v1243
  %v1370 = vpack.c.b16 %v1246, %v1244
  %v1371 = vpack.c.b16 %v1249, %v1247
  %v1372 = vpack.c.b16 %v1250, %v1248
  %v1373 = vpack.c.b16 %v1253, %v1251
  %v1374 = vpack.c.b16 %v1254, %v1252
  %v1375 = vpack.c.b16 %v1257, %v1255
  %v1376 = vpack.c.b16 %v1258, %v1256
  %v1377 = vpack.c.b16 %v1261, %v1259
  %v1378 = vpack.c.b16 %v1262, %v1260
  %v1379 = vpack.c.b16 %v1265, %v1263
  %v1380 = vpack.c.b16 %v1266, %v1264
  %v1381 = vpack.c.b16 %v1269, %v1267
  %v1382 = vpack.c.b16 %v1270, %v1268
  %v1383 = vpack.c.b16 %v1273, %v1271
  %v1384 = vpack.c.b16 %v1274, %v1272
  %v1385 = vpack.c.b16 %v1277, %v1275
  %v1386 = vpack.c.b16 %v1278, %v1276
  %v1387 = vpack.c.b16 %v1281, %v1279
  %v1388 = vpack.c.b16 %v1282, %v1280
  %v1389 = vpack.c.b16 %v1285, %v1283
  %v1390 = vpack.c.b16 %v1286, %v1284
  %v1391 = vpack.c.b16 %v1289, %v1287
  %v1392 = vpack.c.b16 %v1290, %v1288
  %v1393 = vpack.c.b16 %v1293, %v1291
  %v1394 = vpack.c.b16 %v1294, %v1292
  %v1395 = vpack.c.b16 %v1297, %v1295
  %v1396 = vpack.c.b16 %v1298, %v1296
  %v1397 = vpack.c.b16 %v1301, %v1299
  %v1398 = vpack.c.b16 %v1302, %v1300
  %v1399 = vpack.c.b16 %v1305, %v1303
  %v1400 = vpack.c.b16 %v1306, %v1304
  %v1401 = vpack.c.b16 %v1309, %v1307
  %v1402 = vpack.c.b16 %v1310, %v1308
  %v1403 = vpack.c.b16 %v1313, %v1311
  %v1404 = vpack.c.b16 %v1314, %v1312
  %v1405 = vpack.c.b16 %v1317, %v1315
  %v1406 = vpack.c.b16 %v1318, %v1316
  %v1407 = vpack.c.b16 %v1321, %v1319
  %v1408 = vpack.c.b16 %v1322, %v1320
  %v1409 = vpack.c.b16 %v1325, %v1323
  %v1410 = vpack.c.b16 %v1326, %v1324
  %v1411 = vpack.c.b16 %v1329, %v1327
  %v1412 = vpack.c.b16 %v1330, %v1328
  %v1413 = vpack.c.b16 %v1333, %v1331
  %v1414 = vpack.c.b16 %v1334, %v1332
  %v1415 = vpack.c.b16 %v1337, %v1335
  %v1416 = vpack.c.b16 %v1338, %v1336
  %v1417 = vpack.c.b16 %v1341, %v1339
  %v1418 = vpack.c.b16 %v1342, %v1340
  %v1419 = vpack.c.b16 %v1345, %v1343
  %v1420 = vpack.c.b16 %v1346, %v1344
  %v1421 = vpack.c.b16 %v1349, %v1347
  %v1422 = vpack.c.b16 %v1350, %v1348
  %v1423 = vpack.c.b16 %v1353, %v1351
  %v1424 = vpack.c.b16 %v1354, %v1352
  %v1425 = vpack.c.b16 %v1357, %v1355
  %v1426 = vpack.c.b16 %v1358, %v1356
  %v1427 = vpack.c.b16 %v1361, %v1359
  %v1428 = vpack.c.b16 %v1362, %v1360
  %v1429 = vpack.c.b16 %v1365, %v1363
  %v1430 = vpack.c.b16 %v1366, %v1364
  %1495 = vmatprep.subr.bf16.mxu0 %v1368
  %1496 = vmatpush1.bf16.msra.mxu0 %v1367
  %1497 = vmatprep.subr.bf16.mxu0 %v1370
  %1498 = vmatpush1.bf16.msra.mxu0 %v1369
  %1499 = vmatprep.subr.bf16.mxu0 %v1372
  %1500 = vmatpush1.bf16.msra.mxu0 %v1371
  %1501 = vmatprep.subr.bf16.mxu0 %v1374
  %1502 = vmatpush1.bf16.msra.mxu0 %v1373
  %1503 = vmatprep.subr.bf16.mxu0 %v1376
  %1504 = vmatpush1.bf16.msra.mxu0 %v1375
  %1505 = vmatprep.subr.bf16.mxu0 %v1378
  %1506 = vmatpush1.bf16.msra.mxu0 %v1377
  %1507 = vmatprep.subr.bf16.mxu0 %v1380
  %1508 = vmatpush1.bf16.msra.mxu0 %v1379
  %1509 = vmatprep.subr.bf16.mxu0 %v1382
  %1510 = vmatpush1.bf16.msra.mxu0 %v1381
  %1511 = vmatprep.subr.bf16.mxu0 %v1384
  %1512 = vmatpush1.bf16.msra.mxu0 %v1383
  %1513 = vmatprep.subr.bf16.mxu0 %v1386
  %1514 = vmatpush1.bf16.msra.mxu0 %v1385
  %1515 = vmatprep.subr.bf16.mxu0 %v1388
  %1516 = vmatpush1.bf16.msra.mxu0 %v1387
  %1517 = vmatprep.subr.bf16.mxu0 %v1390
  %1518 = vmatpush1.bf16.msra.mxu0 %v1389
  %1519 = vmatprep.subr.bf16.mxu0 %v1392
  %1520 = vmatpush1.bf16.msra.mxu0 %v1391
  %1521 = vmatprep.subr.bf16.mxu0 %v1394
  %1522 = vmatpush1.bf16.msra.mxu0 %v1393
  %1523 = vmatprep.subr.bf16.mxu0 %v1396
  %1524 = vmatpush1.bf16.msra.mxu0 %v1395
  %1525 = vmatprep.subr.bf16.mxu0 %v1398
  %1526 = vmatpush1.bf16.msra.mxu0 %v1397
  %1527 = vmatprep.mubr.bf16.mxu0 %v1168
  %1528 = vmatmul.mubr.bf16.gmra.mrb[0].mxu0 %v1167
  %v1529 = vpop.f32.mrb[0].mxu0
  %v1530 = vadd.f32 %v1148, %v1529
  %v1531 = vpop.f32.mrb[0].mxu0
  %v1532 = vadd.f32 %v1152, %v1531
  %v1533 = vpop.f32.mrb[0].mxu0
  %v1534 = vadd.f32 %v1148, %v1533
  %v1535 = vpop.f32.mrb[0].mxu0
  %v1536 = vadd.f32 %v1152, %v1535
  %1537 = vdwg.mxu0
  %1538 = vmatprep.subr.bf16.mxu0 %v1400
  %1539 = vmatpush1.bf16.msra.mxu0 %v1399
  %1540 = vmatprep.subr.bf16.mxu0 %v1402
  %1541 = vmatpush1.bf16.msra.mxu0 %v1401
  %1542 = vmatprep.subr.bf16.mxu0 %v1404
  %1543 = vmatpush1.bf16.msra.mxu0 %v1403
  %1544 = vmatprep.subr.bf16.mxu0 %v1406
  %1545 = vmatpush1.bf16.msra.mxu0 %v1405
  %1546 = vmatprep.subr.bf16.mxu0 %v1408
  %1547 = vmatpush1.bf16.msra.mxu0 %v1407
  %1548 = vmatprep.subr.bf16.mxu0 %v1410
  %1549 = vmatpush1.bf16.msra.mxu0 %v1409
  %1550 = vmatprep.subr.bf16.mxu0 %v1412
  %1551 = vmatpush1.bf16.msra.mxu0 %v1411
  %1552 = vmatprep.subr.bf16.mxu0 %v1414
  %1553 = vmatpush1.bf16.msra.mxu0 %v1413
  %1554 = vmatprep.subr.bf16.mxu0 %v1416
  %1555 = vmatpush1.bf16.msra.mxu0 %v1415
  %1556 = vmatprep.subr.bf16.mxu0 %v1418
  %1557 = vmatpush1.bf16.msra.mxu0 %v1417
  %1558 = vmatprep.subr.bf16.mxu0 %v1420
  %1559 = vmatpush1.bf16.msra.mxu0 %v1419
  %1560 = vmatprep.subr.bf16.mxu0 %v1422
  %1561 = vmatpush1.bf16.msra.mxu0 %v1421
  %1562 = vmatprep.subr.bf16.mxu0 %v1424
  %1563 = vmatpush1.bf16.msra.mxu0 %v1423
  %1564 = vmatprep.subr.bf16.mxu0 %v1426
  %1565 = vmatpush1.bf16.msra.mxu0 %v1425
  %1566 = vmatprep.subr.bf16.mxu0 %v1428
  %1567 = vmatpush1.bf16.msra.mxu0 %v1427
  %1568 = vmatprep.subr.bf16.mxu0 %v1430
  %1569 = vmatpush1.bf16.msra.mxu0 %v1429
  %1570 = vmatprep.mubr.bf16.mxu0 %v1170
  %1571 = vmatmul.mubr.bf16.gmra.mrb[0].mxu0 %v1169
  %v1572 = vpop.f32.mrb[0].mxu0
  %v1573 = vadd.f32 %v1530, %v1572
  %v1574 = vpop.f32.mrb[0].mxu0
  %v1575 = vadd.f32 %v1532, %v1574
  %v1576 = vpop.f32.mrb[0].mxu0
  %v1577 = vadd.f32 %v1534, %v1576
  %v1578 = vpop.f32.mrb[0].mxu0
  %v1579 = vadd.f32 %v1536, %v1578
  %1580 = vdwg.mxu0
  %v1581 = vpack.c.bf16 %v1577, %v1573
  %v1582 = vpack.c.bf16 %v1579, %v1575
  %v1585 = vunpack.c.l.b16 %v1581
  %v1586 = vunpack.c.l.b16 %v1582
  %v1587 = vunpack.c.h.b16 %v1581
  %v1588 = vunpack.c.h.b16 %v1582
  %v1589 = vpack.c.b16 %v1586, %v1585
  %v1590 = vpack.c.b16 %v1588, %v1587
  %1593 = vst [vmem:[%s11] sm:$0xff] %v1589
  %1594 = vst [vmem:[%s11 + $0x8] sm:$0xff] %v1590
  // Predicated region
  $region38: #{mhatt_forward.3} parent=0 // pred_check
    _
  $region39: #{mhatt_forward.3} parent=0 // pred_check_branch
    %1596 = sbr.rel (0) target = $region41
  $region40: #{mhatt_forward.3} parent=0 // pred_region
    _
  $region41: #{mhatt_forward.3} parent=0 // pred_fallthru
    _
  // Predicated region
  $region42: #{mhatt_forward.3} parent=0 // pred_check
    _
  $region43: #{mhatt_forward.3} parent=0 // pred_check_branch
    %1598 = sbr.rel (0) target = $region45
  $region44: #{mhatt_forward.3} parent=0 // pred_region
    _
  $region45: #{mhatt_forward.3} parent=0 // pred_fallthru
    _
  // Predicated region
  $region46: #{mhatt_forward.3} parent=0 // pred_check
    _
  $region47: #{mhatt_forward.3} parent=0 // pred_check_branch
    %1600 = sbr.rel (0) target = $region49
  $region48: #{mhatt_forward.3} parent=0 // pred_region
    _
  $region49: #{mhatt_forward.3} parent=0 // pred_fallthru
    _
  // Predicated region
  $region50: #{mhatt_forward.3} parent=0 // pred_check
    _
  $region51: #{mhatt_forward.3} parent=0 // pred_check_branch
    %1602 = sbr.rel (0) target = $region53
  $region52: #{mhatt_forward.3} parent=0 // pred_region
    _
  $region53: #{mhatt_forward.3} parent=0 // pred_fallthru
    _
  // Predicated region
  $region54: #{mhatt_forward.3} parent=0 // pred_check
    _
  $region55: #{mhatt_forward.3} parent=0 // pred_check_branch
    %1604 = sbr.rel (0) target = $region57
  $region56: #{mhatt_forward.3} parent=0 // pred_region
    _
  $region57: #{mhatt_forward.3} parent=0 // pred_fallthru
    _
  // Predicated region
  $region58: #{mhatt_forward.3} parent=0 // pred_check
    _
  $region59: #{mhatt_forward.3} parent=0 // pred_check_branch
    %1606 = sbr.rel (0) target = $region61
  $region60: #{mhatt_forward.3} parent=0 // pred_region
    _
  $region61: #{mhatt_forward.3} parent=0 // pred_fallthru
    _

</llo_original>
